<compile_context>
chip_gen: v7x
topology: tpu7x:2x2x1
jax: 0.10.0
libtpu: 0.0.40
codegen_flags: <defaults>
</compile_context>

<pallas_src>
import numpy as np
import jax
import jax.numpy as jnp
from jax.experimental import pallas as pl
from jax.experimental.pallas import tpu as pltpu

LEAKY_SLOPE = 0.2
HID_SIZE = 2
LANE = 128


def _round_up(n, m):
    return ((n + m - 1) // m) * m


def dense_ae_kernel(x_ref,
                    w1, b1, w2, b2, w3, b3,   # encoder
                    w4, b4, w5, b5, w6, b6,   # decoder
                    out_ref):
    """Whole AE forward for one (TB, D) batch tile resident in VMEM."""

    def lin(h, w_ref, b_ref):
        # bf16 operands on the MXU, f32 accumulation, f32 bias add.
        return jnp.dot(h, w_ref[...], preferred_element_type=jnp.float32) + b_ref[...]

    def leaky(h):
        # LeakyReLU(0.2): single vmax (equivalent to cmp+select for 0<slope<1).
        return jnp.maximum(h, LEAKY_SLOPE * h)

    bf16 = jnp.bfloat16
    x = x_ref[...]                                   # (TB, D) bf16
    # --- encoder ---
    h = leaky(lin(x, w1, b1)).astype(bf16)           # dense(D, 128)  + LeakyReLU
    h = leaky(lin(h, w2, b2)).astype(bf16)           # dense(128, 16) + LeakyReLU
    z = lin(h, w3, b3).astype(bf16)                  # dense(16, hid)  (no act)
    # --- decoder ---
    h = leaky(lin(z, w4, b4)).astype(bf16)           # dense(hid, 16) + LeakyReLU
    h = leaky(lin(h, w5, b5)).astype(bf16)           # dense(16, 128) + LeakyReLU
    y = lin(h, w6, b6)                               # dense(128, D) logits, f32
    # Sigmoid: exp and approx reciprocal both go to the EUP (frees VPU slots
    # on the widest element-wise op in the kernel).
    out_ref[...] = pl.reciprocal(1.0 + jnp.exp(-y), approx=True)


def init_params(key, dims, hid_size=HID_SIZE):
    """PyTorch-Linear-style init U(-1/sqrt(fan_in), +1/sqrt(fan_in)).

    Weights stored as (in, out) so the kernel computes y = x @ W + b.
    """
    sizes = [(dims, 128), (128, 16), (16, hid_size),
             (hid_size, 16), (16, 128), (128, dims)]
    params = []
    for fan_in, fan_out in sizes:
        key, kw, kb = jax.random.split(key, 3)
        bound = 1.0 / np.sqrt(fan_in)
        w = jax.random.uniform(kw, (fan_in, fan_out), jnp.float32, -bound, bound)
        b = jax.random.uniform(kb, (1, fan_out), jnp.float32, -bound, bound)
        params.append((w, b))
    return params


def pad_and_cast_params(params):
    """Zero-pad every dim to a lane multiple; weights -> bf16, biases stay f32.

    Zero padding is semantics-preserving: LeakyReLU(0)=0, and padded output
    columns (sigmoid(0)=0.5) are sliced off on the host.
    """
    flat = []
    for w, b in params:
        fi, fo = w.shape
        fip, fop = _round_up(fi, LANE), _round_up(fo, LANE)
        wp = jnp.zeros((fip, fop), jnp.float32).at[:fi, :fo].set(w).astype(jnp.bfloat16)
        bp = jnp.zeros((1, fop), jnp.float32).at[:, :fo].set(b)
        flat += [wp, bp]
    return tuple(flat)


def _pick_batch_tile(B):
    if B >= 256:
        return 256          # fills the 2x256 MXU rows on v6e / v7x
    if B >= 128:
        return 128          # fills the 4x128 MXU rows on v5e
    return _round_up(B, 8)  # at least a full f32/bf16 sublane group


@jax.jit
def dense_ae_forward(x, flat_params):
    """x: (B, C, H, W) float32. Returns the sigmoid reconstruction, same shape."""
    B = x.shape[0]
    dims = int(np.prod(x.shape[1:]))
    D = _round_up(dims, LANE)
    tb = _pick_batch_tile(B)
    B_pad = _round_up(B, tb)
    nb = B_pad // tb

    # Flatten NCHW -> (B, dims) (row-major, same as nn.Flatten), cast to bf16
    # (halves the x-tile DMA) and zero-pad batch / features.
    x_flat = x.reshape(B, dims).astype(jnp.bfloat16)
    x_pad = jnp.zeros((B_pad, D), jnp.bfloat16).at[:B, :dims].set(x_flat)

    io_spec_in = pl.BlockSpec((tb, D), lambda i: (i, 0))
    io_spec_out = pl.BlockSpec((tb, D), lambda i: (i, 0))
    # Constant index map => weights/biases are fetched once and stay resident
    # in VMEM across all batch tiles; only x/out slabs stream through the
    # double-buffered pipeline.
    w_specs = [pl.BlockSpec(p.shape, lambda i: (0, 0)) for p in flat_params]

    # VMEM budget: resident params (+pipeline copy) + double-buffered in/out
    # tiles + activation headroom.
    w_bytes = sum(int(np.prod(p.shape)) * p.dtype.itemsize for p in flat_params)
    io_bytes = tb * D * (2 + 4)                      # bf16 in + f32 out per tile
    vmem_limit = int(min(48 << 20,
                         max(2 * w_bytes + 2 * io_bytes + (4 << 20), 16 << 20)))

    cost = pl.CostEstimate(
        flops=2 * B_pad * (D * 128 + 4 * 128 * 128 + 128 * D),
        transcendentals=B_pad * D,                   # exp (+ approx recip) per output
        bytes_accessed=x_pad.size * 2 + B_pad * D * 4 + w_bytes,
    )

    out = pl.pallas_call(
        dense_ae_kernel,
        out_shape=jax.ShapeDtypeStruct((B_pad, D), jnp.float32),
        grid_spec=pltpu.PrefetchScalarGridSpec(
            num_scalar_prefetch=0,
            grid=(nb,),
            in_specs=[io_spec_in] + w_specs,
            out_specs=io_spec_out,
        ),
        compiler_params=pltpu.CompilerParams(
            dimension_semantics=("parallel",),       # shard batch tiles across TCs (v7x)
            vmem_limit_bytes=vmem_limit,
        ),
        cost_estimate=cost,
    )(x_pad, *flat_params)

    # Drop padded batch rows and padded feature columns (those carry
    # sigmoid(0)=0.5), then restore the NCHW layout (Reshape(-1, *x.shape[1:])).
    return out[:B, :dims].reshape(x.shape)


def reference_forward(x, params):
    """Pure-JAX f32 reference of the same forward pass (unpadded params)."""
    B = x.shape[0]
    dims = int(np.prod(x.shape[1:]))
    xf = x.reshape(B, dims)

    def leaky(h):
        return jnp.where(h > 0, h, LEAKY_SLOPE * h)

    (w1, b1), (w2, b2), (w3, b3), (w4, b4), (w5, b5), (w6, b6) = params
    h = leaky(xf @ w1 + b1)
    h = leaky(h @ w2 + b2)
    z = h @ w3 + b3
    h = leaky(z @ w4 + b4)
    h = leaky(h @ w5 + b5)
    y = h @ w6 + b6
    return jax.nn.sigmoid(y).reshape(x.shape)


if __name__ == "__main__":
    key = jax.random.PRNGKey(0)
    k_x, k_p = jax.random.split(key)

    # Small NCHW input consistent with the module: B=2, C=4, H=W=16 -> dims=1024.
    B, C, H, W = 2, 4, 16, 16
    x = jax.random.uniform(k_x, (B, C, H, W), jnp.float32)  # image-like data in [0, 1)
    dims = C * H * W

    params = init_params(k_p, dims, HID_SIZE)
    flat_params = pad_and_cast_params(params)

    out = dense_ae_forward(x, flat_params)
    out = jax.block_until_ready(out)

    ref = reference_forward(x, params)
    assert out.shape == x.shape and out.dtype == jnp.float32
    # bf16 matmul operands + approx reciprocal vs f32 reference: loose tolerance.
    np.testing.assert_allclose(np.asarray(out), np.asarray(ref), rtol=2e-2, atol=2e-2)

    print("KERNEL_OK")
</pallas_src>

<mosaic_0001>
module attributes {stable_mosaic.version = 11 : i64} {
  func.func @dense_ae_kernel(%arg0: i32, %arg1: memref<8x1024xbf16, #tpu.memory_space<vmem>>, %arg2: memref<1024x128xbf16, #tpu.memory_space<vmem>>, %arg3: memref<1x128xf32, #tpu.memory_space<vmem>>, %arg4: memref<128x128xbf16, #tpu.memory_space<vmem>>, %arg5: memref<1x128xf32, #tpu.memory_space<vmem>>, %arg6: memref<128x128xbf16, #tpu.memory_space<vmem>>, %arg7: memref<1x128xf32, #tpu.memory_space<vmem>>, %arg8: memref<128x128xbf16, #tpu.memory_space<vmem>>, %arg9: memref<1x128xf32, #tpu.memory_space<vmem>>, %arg10: memref<128x128xbf16, #tpu.memory_space<vmem>>, %arg11: memref<1x128xf32, #tpu.memory_space<vmem>>, %arg12: memref<128x1024xbf16, #tpu.memory_space<vmem>>, %arg13: memref<1x1024xf32, #tpu.memory_space<vmem>>, %arg14: memref<8x1024xf32, #tpu.memory_space<vmem>>) attributes {dimension_semantics = [#tpu.dimension_semantics<parallel>], iteration_bounds = array<i64: 1>, scalar_prefetch = 0 : i64, scratch_operands = 0 : i64, tpu.core_type = #tpu.core_type<tc>, window_params = [{transform_indices = @transform_0, window_bounds = array<i64: 8, 1024>}, {pipeline_mode = #tpu.pipeline_mode<synchronous>, transform_indices = @transform_1, window_bounds = array<i64: 1024, 128>}, {pipeline_mode = #tpu.pipeline_mode<synchronous>, transform_indices = @transform_2, window_bounds = array<i64: 1, 128>}, {pipeline_mode = #tpu.pipeline_mode<synchronous>, transform_indices = @transform_3, window_bounds = array<i64: 128, 128>}, {pipeline_mode = #tpu.pipeline_mode<synchronous>, transform_indices = @transform_4, window_bounds = array<i64: 1, 128>}, {pipeline_mode = #tpu.pipeline_mode<synchronous>, transform_indices = @transform_5, window_bounds = array<i64: 128, 128>}, {pipeline_mode = #tpu.pipeline_mode<synchronous>, transform_indices = @transform_6, window_bounds = array<i64: 1, 128>}, {pipeline_mode = #tpu.pipeline_mode<synchronous>, transform_indices = @transform_7, window_bounds = array<i64: 128, 128>}, {pipeline_mode = #tpu.pipeline_mode<synchronous>, transform_indices = @transform_8, window_bounds = array<i64: 1, 128>}, {pipeline_mode = #tpu.pipeline_mode<synchronous>, transform_indices = @transform_9, window_bounds = array<i64: 128, 128>}, {pipeline_mode = #tpu.pipeline_mode<synchronous>, transform_indices = @transform_10, window_bounds = array<i64: 1, 128>}, {pipeline_mode = #tpu.pipeline_mode<synchronous>, transform_indices = @transform_11, window_bounds = array<i64: 128, 1024>}, {pipeline_mode = #tpu.pipeline_mode<synchronous>, transform_indices = @transform_12, window_bounds = array<i64: 1, 1024>}, {transform_indices = @transform_13, window_bounds = array<i64: 8, 1024>}]} {
    %c0 = arith.constant 0 : index
    %c0_0 = arith.constant 0 : index
    %0 = vector.load %arg1[%c0, %c0_0] : memref<8x1024xbf16, #tpu.memory_space<vmem>>, vector<8x1024xbf16>
    %c0_1 = arith.constant 0 : index
    %c0_2 = arith.constant 0 : index
    %1 = vector.load %arg2[%c0_1, %c0_2] : memref<1024x128xbf16, #tpu.memory_space<vmem>>, vector<1024x128xbf16>
    %cst = arith.constant dense<0.000000e+00> : vector<8x128xf32>
    %2 = tpu.matmul %0, %1, %cst {dimension_numbers = #tpu.dot_dimension_numbers<[1], [0], [0], [1], [0, 0, 1, 1], [], []>} : vector<8x1024xbf16>, vector<1024x128xbf16>, vector<8x128xf32> -> vector<8x128xf32>
    %c0_3 = arith.constant 0 : index
    %c0_4 = arith.constant 0 : index
    %3 = vector.load %arg3[%c0_3, %c0_4] : memref<1x128xf32, #tpu.memory_space<vmem>>, vector<1x128xf32>
    %4 = vector.broadcast %3 : vector<1x128xf32> to vector<8x128xf32>
    %5 = arith.addf %2, %4 : vector<8x128xf32>
    %cst_5 = arith.constant 2.000000e-01 : f32
    %6 = vector.broadcast %cst_5 : f32 to vector<8x128xf32>
    %7 = arith.mulf %6, %5 : vector<8x128xf32>
    %8 = arith.maximumf %5, %7 : vector<8x128xf32>
    %9 = arith.truncf %8 : vector<8x128xf32> to vector<8x128xbf16>
    %c0_6 = arith.constant 0 : index
    %c0_7 = arith.constant 0 : index
    %10 = vector.load %arg4[%c0_6, %c0_7] : memref<128x128xbf16, #tpu.memory_space<vmem>>, vector<128x128xbf16>
    %cst_8 = arith.constant dense<0.000000e+00> : vector<8x128xf32>
    %11 = tpu.matmul %9, %10, %cst_8 {dimension_numbers = #tpu.dot_dimension_numbers<[1], [0], [0], [1], [0, 0, 1, 1], [], []>} : vector<8x128xbf16>, vector<128x128xbf16>, vector<8x128xf32> -> vector<8x128xf32>
    %c0_9 = arith.constant 0 : index
    %c0_10 = arith.constant 0 : index
    %12 = vector.load %arg5[%c0_9, %c0_10] : memref<1x128xf32, #tpu.memory_space<vmem>>, vector<1x128xf32>
    %13 = vector.broadcast %12 : vector<1x128xf32> to vector<8x128xf32>
    %14 = arith.addf %11, %13 : vector<8x128xf32>
    %cst_11 = arith.constant 2.000000e-01 : f32
    %15 = vector.broadcast %cst_11 : f32 to vector<8x128xf32>
    %16 = arith.mulf %15, %14 : vector<8x128xf32>
    %17 = arith.maximumf %14, %16 : vector<8x128xf32>
    %18 = arith.truncf %17 : vector<8x128xf32> to vector<8x128xbf16>
    %c0_12 = arith.constant 0 : index
    %c0_13 = arith.constant 0 : index
    %19 = vector.load %arg6[%c0_12, %c0_13] : memref<128x128xbf16, #tpu.memory_space<vmem>>, vector<128x128xbf16>
    %cst_14 = arith.constant dense<0.000000e+00> : vector<8x128xf32>
    %20 = tpu.matmul %18, %19, %cst_14 {dimension_numbers = #tpu.dot_dimension_numbers<[1], [0], [0], [1], [0, 0, 1, 1], [], []>} : vector<8x128xbf16>, vector<128x128xbf16>, vector<8x128xf32> -> vector<8x128xf32>
    %c0_15 = arith.constant 0 : index
    %c0_16 = arith.constant 0 : index
    %21 = vector.load %arg7[%c0_15, %c0_16] : memref<1x128xf32, #tpu.memory_space<vmem>>, vector<1x128xf32>
    %22 = vector.broadcast %21 : vector<1x128xf32> to vector<8x128xf32>
    %23 = arith.addf %20, %22 : vector<8x128xf32>
    %24 = arith.truncf %23 : vector<8x128xf32> to vector<8x128xbf16>
    %c0_17 = arith.constant 0 : index
    %c0_18 = arith.constant 0 : index
    %25 = vector.load %arg8[%c0_17, %c0_18] : memref<128x128xbf16, #tpu.memory_space<vmem>>, vector<128x128xbf16>
    %cst_19 = arith.constant dense<0.000000e+00> : vector<8x128xf32>
    %26 = tpu.matmul %24, %25, %cst_19 {dimension_numbers = #tpu.dot_dimension_numbers<[1], [0], [0], [1], [0, 0, 1, 1], [], []>} : vector<8x128xbf16>, vector<128x128xbf16>, vector<8x128xf32> -> vector<8x128xf32>
    %c0_20 = arith.constant 0 : index
    %c0_21 = arith.constant 0 : index
    %27 = vector.load %arg9[%c0_20, %c0_21] : memref<1x128xf32, #tpu.memory_space<vmem>>, vector<1x128xf32>
    %28 = vector.broadcast %27 : vector<1x128xf32> to vector<8x128xf32>
    %29 = arith.addf %26, %28 : vector<8x128xf32>
    %cst_22 = arith.constant 2.000000e-01 : f32
    %30 = vector.broadcast %cst_22 : f32 to vector<8x128xf32>
    %31 = arith.mulf %30, %29 : vector<8x128xf32>
    %32 = arith.maximumf %29, %31 : vector<8x128xf32>
    %33 = arith.truncf %32 : vector<8x128xf32> to vector<8x128xbf16>
    %c0_23 = arith.constant 0 : index
    %c0_24 = arith.constant 0 : index
    %34 = vector.load %arg10[%c0_23, %c0_24] : memref<128x128xbf16, #tpu.memory_space<vmem>>, vector<128x128xbf16>
    %cst_25 = arith.constant dense<0.000000e+00> : vector<8x128xf32>
    %35 = tpu.matmul %33, %34, %cst_25 {dimension_numbers = #tpu.dot_dimension_numbers<[1], [0], [0], [1], [0, 0, 1, 1], [], []>} : vector<8x128xbf16>, vector<128x128xbf16>, vector<8x128xf32> -> vector<8x128xf32>
    %c0_26 = arith.constant 0 : index
    %c0_27 = arith.constant 0 : index
    %36 = vector.load %arg11[%c0_26, %c0_27] : memref<1x128xf32, #tpu.memory_space<vmem>>, vector<1x128xf32>
    %37 = vector.broadcast %36 : vector<1x128xf32> to vector<8x128xf32>
    %38 = arith.addf %35, %37 : vector<8x128xf32>
    %cst_28 = arith.constant 2.000000e-01 : f32
    %39 = vector.broadcast %cst_28 : f32 to vector<8x128xf32>
    %40 = arith.mulf %39, %38 : vector<8x128xf32>
    %41 = arith.maximumf %38, %40 : vector<8x128xf32>
    %42 = arith.truncf %41 : vector<8x128xf32> to vector<8x128xbf16>
    %c0_29 = arith.constant 0 : index
    %c0_30 = arith.constant 0 : index
    %43 = vector.load %arg12[%c0_29, %c0_30] : memref<128x1024xbf16, #tpu.memory_space<vmem>>, vector<128x1024xbf16>
    %cst_31 = arith.constant dense<0.000000e+00> : vector<8x1024xf32>
    %44 = tpu.matmul %42, %43, %cst_31 {dimension_numbers = #tpu.dot_dimension_numbers<[1], [0], [0], [1], [0, 0, 1, 1], [], []>} : vector<8x128xbf16>, vector<128x1024xbf16>, vector<8x1024xf32> -> vector<8x1024xf32>
    %c0_32 = arith.constant 0 : index
    %c0_33 = arith.constant 0 : index
    %45 = vector.load %arg13[%c0_32, %c0_33] : memref<1x1024xf32, #tpu.memory_space<vmem>>, vector<1x1024xf32>
    %46 = vector.broadcast %45 : vector<1x1024xf32> to vector<8x1024xf32>
    %47 = arith.addf %44, %46 : vector<8x1024xf32>
    %cst_34 = arith.constant 0.000000e+00 : f32
    %48 = vector.broadcast %cst_34 : f32 to vector<8x1024xf32>
    %49 = arith.subf %48, %47 : vector<8x1024xf32>
    %50 = math.exp %49 : vector<8x1024xf32>
    %cst_35 = arith.constant 1.000000e+00 : f32
    %51 = vector.broadcast %cst_35 : f32 to vector<8x1024xf32>
    %52 = arith.addf %51, %50 : vector<8x1024xf32>
    %53 = tpu.reciprocal %52 {approx = true} : vector<8x1024xf32> -> vector<8x1024xf32>
    %c0_36 = arith.constant 0 : index
    %c0_37 = arith.constant 0 : index
    %54 = vector.load %arg14[%c0_36, %c0_37] : memref<8x1024xf32, #tpu.memory_space<vmem>>, vector<8x1024xf32>
    tpu.vector_store %arg14[%c0_36, %c0_37], %53 {strides = array<i32>} : memref<8x1024xf32, #tpu.memory_space<vmem>>, vector<8x1024xf32>,
    return
  }
  func.func @transform_0(%arg0: i32) -> (i32, i32) {
    %c0_i32 = arith.constant 0 : i32
    %c0_i32_0 = arith.constant 0 : i32
    return %arg0, %c0_i32 : i32, i32
  }
  func.func @transform_1(%arg0: i32) -> (i32, i32) {
    %c0_i32 = arith.constant 0 : i32
    %c0_i32_0 = arith.constant 0 : i32
    %c0_i32_1 = arith.constant 0 : i32
    return %c0_i32, %c0_i32_0 : i32, i32
  }
  func.func @transform_2(%arg0: i32) -> (i32, i32) {
    %c0_i32 = arith.constant 0 : i32
    %c0_i32_0 = arith.constant 0 : i32
    %c0_i32_1 = arith.constant 0 : i32
    return %c0_i32, %c0_i32_0 : i32, i32
  }
  func.func @transform_3(%arg0: i32) -> (i32, i32) {
    %c0_i32 = arith.constant 0 : i32
    %c0_i32_0 = arith.constant 0 : i32
    %c0_i32_1 = arith.constant 0 : i32
    return %c0_i32, %c0_i32_0 : i32, i32
  }
  func.func @transform_4(%arg0: i32) -> (i32, i32) {
    %c0_i32 = arith.constant 0 : i32
    %c0_i32_0 = arith.constant 0 : i32
    %c0_i32_1 = arith.constant 0 : i32
    return %c0_i32, %c0_i32_0 : i32, i32
  }
  func.func @transform_5(%arg0: i32) -> (i32, i32) {
    %c0_i32 = arith.constant 0 : i32
    %c0_i32_0 = arith.constant 0 : i32
    %c0_i32_1 = arith.constant 0 : i32
    return %c0_i32, %c0_i32_0 : i32, i32
  }
  func.func @transform_6(%arg0: i32) -> (i32, i32) {
    %c0_i32 = arith.constant 0 : i32
    %c0_i32_0 = arith.constant 0 : i32
    %c0_i32_1 = arith.constant 0 : i32
    return %c0_i32, %c0_i32_0 : i32, i32
  }
  func.func @transform_7(%arg0: i32) -> (i32, i32) {
    %c0_i32 = arith.constant 0 : i32
    %c0_i32_0 = arith.constant 0 : i32
    %c0_i32_1 = arith.constant 0 : i32
    return %c0_i32, %c0_i32_0 : i32, i32
  }
  func.func @transform_8(%arg0: i32) -> (i32, i32) {
    %c0_i32 = arith.constant 0 : i32
    %c0_i32_0 = arith.constant 0 : i32
    %c0_i32_1 = arith.constant 0 : i32
    return %c0_i32, %c0_i32_0 : i32, i32
  }
  func.func @transform_9(%arg0: i32) -> (i32, i32) {
    %c0_i32 = arith.constant 0 : i32
    %c0_i32_0 = arith.constant 0 : i32
    %c0_i32_1 = arith.constant 0 : i32
    return %c0_i32, %c0_i32_0 : i32, i32
  }
  func.func @transform_10(%arg0: i32) -> (i32, i32) {
    %c0_i32 = arith.constant 0 : i32
    %c0_i32_0 = arith.constant 0 : i32
    %c0_i32_1 = arith.constant 0 : i32
    return %c0_i32, %c0_i32_0 : i32, i32
  }
  func.func @transform_11(%arg0: i32) -> (i32, i32) {
    %c0_i32 = arith.constant 0 : i32
    %c0_i32_0 = arith.constant 0 : i32
    %c0_i32_1 = arith.constant 0 : i32
    return %c0_i32, %c0_i32_0 : i32, i32
  }
  func.func @transform_12(%arg0: i32) -> (i32, i32) {
    %c0_i32 = arith.constant 0 : i32
    %c0_i32_0 = arith.constant 0 : i32
    %c0_i32_1 = arith.constant 0 : i32
    return %c0_i32, %c0_i32_0 : i32, i32
  }
  func.func @transform_13(%arg0: i32) -> (i32, i32) {
    %c0_i32 = arith.constant 0 : i32
    %c0_i32_0 = arith.constant 0 : i32
    return %arg0, %c0_i32 : i32, i32
  }
}

</mosaic_0001>

<llo_original>
// kernel: dense_ae_forward.1
$region0: #{dense_ae_forward.1}
  #allocation0 [shape = 'u32[]', space=smem, size = 0x4, offset = 0x4, fixed_abs, tag = 'smem constant byte address 0x4 - core index']
  #allocation1 [shape = 'u32[144,128]{1,0:T(1,128)}', space=vmem, size = 0x12000, scoped, tag = 'internal scratch']
  %s0 = inlined_call_operand.vmem [shape: bf16[8,1024], index: 0, kind: input, shape index: {}]
  %s1 = inlined_call_operand.hbm [shape: bf16[1024,128], index: 1, kind: input, shape index: {}]
  %s2 = inlined_call_operand.vmem [shape: f32[1,128], index: 2, kind: input, shape index: {}]
  %s3 = inlined_call_operand.vmem [shape: bf16[128,128], index: 3, kind: input, shape index: {}]
  %s4 = inlined_call_operand.vmem [shape: f32[1,128], index: 4, kind: input, shape index: {}]
  %s5 = inlined_call_operand.vmem [shape: bf16[128,128], index: 5, kind: input, shape index: {}]
  %s6 = inlined_call_operand.vmem [shape: f32[1,128], index: 6, kind: input, shape index: {}]
  %s7 = inlined_call_operand.vmem [shape: bf16[128,128], index: 7, kind: input, shape index: {}]
  %s8 = inlined_call_operand.vmem [shape: f32[1,128], index: 8, kind: input, shape index: {}]
  %s9 = inlined_call_operand.vmem [shape: bf16[128,128], index: 9, kind: input, shape index: {}]
  %s10 = inlined_call_operand.vmem [shape: f32[1,128], index: 10, kind: input, shape index: {}]
  %s11 = inlined_call_operand.hbm [shape: bf16[128,1024], index: 11, kind: input, shape index: {}]
  %s12 = inlined_call_operand.vmem [shape: f32[1,1024], index: 12, kind: input, shape index: {}]
  %s13 = inlined_call_operand.vmem [shape: f32[8,1024], index: 13, kind: output, shape index: {}]
  %s14 = sld [smem:[#allocation0]]
  $region70: #{dense_ae_forward.1} parent=0
    _
  %s16 = ssub.s32 1, %s14
  %s17 = scalar_select 0, %s16, %s14
  $region1: #{dense_ae_forward.1} parent=0
    #allocation2 [shape = 'u8[262144]{0}', space=vmem, size = 0x40000, scoped, tag = 'input window, operand 1, single buffered']
    #allocation3 [shape = 's32[1]{0}', space=sflag, size = 0x4, scoped, tag = 'scoped memory for dense_ae_forward.1']
    #allocation4 [shape = 'u8[262144]{0}', space=vmem, size = 0x40000, scoped, tag = 'input window, operand 11, single buffered']
    #allocation5 [shape = 's32[1]{0}', space=sflag, size = 0x4, scoped, tag = 'scoped memory for dense_ae_forward.1']
    %18 = vsyncpa [#allocation3], 0
    %19 = vsyncpa [#allocation5], 0
    // Predicated region
    $region2: #{dense_ae_forward.1} parent=1 // pred_check
      _
    $region3: #{dense_ae_forward.1} parent=1 // pred_check_branch
      %21 = sbr.rel (0) target = $region5
    $region4: #{dense_ae_forward.1} parent=1 // pred_region
      _
    $region5: #{dense_ae_forward.1} parent=1 // pred_fallthru
      _
    // Predicated region
    $region6: #{dense_ae_forward.1} parent=1 // pred_check
      _
    $region7: #{dense_ae_forward.1} parent=1 // pred_check_branch
      %23 = sbr.rel (0) target = $region9
    $region8: #{dense_ae_forward.1} parent=1 // pred_region
      %s25 = ssub.s32 8192, 8192
      %26 = vsyncadd [#allocation3], %s25
      %s27 = sshll.u32 [#allocation2], 4
      %s28 = int_to_ptr.vmem [resolvable:$true] %s27
      %33 = dma.hbm_to_vmem [thread:$0]  %s1, 8192, %s28, [#allocation3], 64, 64, 4
    $region9: #{dense_ae_forward.1} parent=1 // pred_fallthru
      _
    // Predicated region
    $region10: #{dense_ae_forward.1} parent=1 // pred_check
      _
    $region11: #{dense_ae_forward.1} parent=1 // pred_check_branch
      %35 = sbr.rel (0) target = $region13
    $region12: #{dense_ae_forward.1} parent=1 // pred_region
      _
    $region13: #{dense_ae_forward.1} parent=1 // pred_fallthru
      _
    // Predicated region
    $region14: #{dense_ae_forward.1} parent=1 // pred_check
      _
    $region15: #{dense_ae_forward.1} parent=1 // pred_check_branch
      %37 = sbr.rel (0) target = $region17
    $region16: #{dense_ae_forward.1} parent=1 // pred_region
      _
    $region17: #{dense_ae_forward.1} parent=1 // pred_fallthru
      _
    // Predicated region
    $region18: #{dense_ae_forward.1} parent=1 // pred_check
      _
    $region19: #{dense_ae_forward.1} parent=1 // pred_check_branch
      %39 = sbr.rel (0) target = $region21
    $region20: #{dense_ae_forward.1} parent=1 // pred_region
      _
    $region21: #{dense_ae_forward.1} parent=1 // pred_fallthru
      _
    // Predicated region
    $region22: #{dense_ae_forward.1} parent=1 // pred_check
      _
    $region23: #{dense_ae_forward.1} parent=1 // pred_check_branch
      %41 = sbr.rel (0) target = $region25
    $region24: #{dense_ae_forward.1} parent=1 // pred_region
      _
    $region25: #{dense_ae_forward.1} parent=1 // pred_fallthru
      _
    // Predicated region
    $region26: #{dense_ae_forward.1} parent=1 // pred_check
      _
    $region27: #{dense_ae_forward.1} parent=1 // pred_check_branch
      %43 = sbr.rel (0) target = $region29
    $region28: #{dense_ae_forward.1} parent=1 // pred_region
      _
    $region29: #{dense_ae_forward.1} parent=1 // pred_fallthru
      _
    // Predicated region
    $region30: #{dense_ae_forward.1} parent=1 // pred_check
      _
    $region31: #{dense_ae_forward.1} parent=1 // pred_check_branch
      %45 = sbr.rel (0) target = $region33
    $region32: #{dense_ae_forward.1} parent=1 // pred_region
      _
    $region33: #{dense_ae_forward.1} parent=1 // pred_fallthru
      _
    // Predicated region
    $region34: #{dense_ae_forward.1} parent=1 // pred_check
      _
    $region35: #{dense_ae_forward.1} parent=1 // pred_check_branch
      %47 = sbr.rel (0) target = $region37
    $region36: #{dense_ae_forward.1} parent=1 // pred_region
      _
    $region37: #{dense_ae_forward.1} parent=1 // pred_fallthru
      _
    // Predicated region
    $region38: #{dense_ae_forward.1} parent=1 // pred_check
      _
    $region39: #{dense_ae_forward.1} parent=1 // pred_check_branch
      %49 = sbr.rel (0) target = $region41
    $region40: #{dense_ae_forward.1} parent=1 // pred_region
      _
    $region41: #{dense_ae_forward.1} parent=1 // pred_fallthru
      _
    // Predicated region
    $region42: #{dense_ae_forward.1} parent=1 // pred_check
      _
    $region43: #{dense_ae_forward.1} parent=1 // pred_check_branch
      %51 = sbr.rel (0) target = $region45
    $region44: #{dense_ae_forward.1} parent=1 // pred_region
      _
    $region45: #{dense_ae_forward.1} parent=1 // pred_fallthru
      _
    // Predicated region
    $region46: #{dense_ae_forward.1} parent=1 // pred_check
      _
    $region47: #{dense_ae_forward.1} parent=1 // pred_check_branch
      %53 = sbr.rel (0) target = $region49
    $region48: #{dense_ae_forward.1} parent=1 // pred_region
      %s55 = ssub.s32 8192, 8192
      %56 = vsyncadd [#allocation5], %s55
      %s57 = sshll.u32 [#allocation4], 4
      %s58 = int_to_ptr.vmem [resolvable:$true] %s57
      %63 = dma.hbm_to_vmem [thread:$0]  %s11, 8192, %s58, [#allocation5], 512, 512, 32
    $region49: #{dense_ae_forward.1} parent=1 // pred_fallthru
      _
    // Predicated region
    $region50: #{dense_ae_forward.1} parent=1 // pred_check
      _
    $region51: #{dense_ae_forward.1} parent=1 // pred_check_branch
      %65 = sbr.rel (0) target = $region53
    $region52: #{dense_ae_forward.1} parent=1 // pred_region
      _
    $region53: #{dense_ae_forward.1} parent=1 // pred_fallthru
      _
    // Predicated region
    $region54: #{dense_ae_forward.1} parent=1 // pred_check
      _
    $region55: #{dense_ae_forward.1} parent=1 // pred_check_branch
      %67 = sbr.rel (0) target = $region57
    $region56: #{dense_ae_forward.1} parent=1 // pred_region
      %68 = dma.done [#allocation3], 8192
    $region57: #{dense_ae_forward.1} parent=1 // pred_fallthru
      _
    // Predicated region
    $region58: #{dense_ae_forward.1} parent=1 // pred_check
      _
    $region59: #{dense_ae_forward.1} parent=1 // pred_check_branch
      %70 = sbr.rel (0) target = $region61
    $region60: #{dense_ae_forward.1} parent=1 // pred_region
      %71 = dma.done [#allocation5], 8192
    $region61: #{dense_ae_forward.1} parent=1 // pred_fallthru
      _
    %v73 = vld [vmem:[%s0] sm:$0xff]
    %v74 = vld [vmem:[%s0 + $0x8] sm:$0xff]
    %v75 = vld [vmem:[%s0 + $0x10] sm:$0xff]
    %v76 = vld [vmem:[%s0 + $0x18] sm:$0xff]
    %v77 = vld [vmem:[#allocation2] sm:$0xf]
    %v78 = vld [vmem:[#allocation2 + $0x4] sm:$0xf]
    %v79 = vld [vmem:[#allocation2 + $0x8] sm:$0xf]
    %v80 = vld [vmem:[#allocation2 + $0xc] sm:$0xf]
    %v81 = vld [vmem:[#allocation2 + $0x10] sm:$0xf]
    %v82 = vld [vmem:[#allocation2 + $0x14] sm:$0xf]
    %v83 = vld [vmem:[#allocation2 + $0x18] sm:$0xf]
    %v84 = vld [vmem:[#allocation2 + $0x1c] sm:$0xf]
    %v85 = vld [vmem:[#allocation2 + $0x20] sm:$0xf]
    %v86 = vld [vmem:[#allocation2 + $0x24] sm:$0xf]
    %v87 = vld [vmem:[#allocation2 + $0x28] sm:$0xf]
    %v88 = vld [vmem:[#allocation2 + $0x2c] sm:$0xf]
    %v89 = vld [vmem:[#allocation2 + $0x30] sm:$0xf]
    %v90 = vld [vmem:[#allocation2 + $0x34] sm:$0xf]
    %v91 = vld [vmem:[#allocation2 + $0x38] sm:$0xf]
    %v92 = vld [vmem:[#allocation2 + $0x3c] sm:$0xf]
    %v93 = vld [vmem:[#allocation2 + $0x40] sm:$0xf]
    %v94 = vld [vmem:[#allocation2 + $0x44] sm:$0xf]
    %v95 = vld [vmem:[#allocation2 + $0x48] sm:$0xf]
    %v96 = vld [vmem:[#allocation2 + $0x4c] sm:$0xf]
    %v97 = vld [vmem:[#allocation2 + $0x50] sm:$0xf]
    %v98 = vld [vmem:[#allocation2 + $0x54] sm:$0xf]
    %v99 = vld [vmem:[#allocation2 + $0x58] sm:$0xf]
    %v100 = vld [vmem:[#allocation2 + $0x5c] sm:$0xf]
    %v101 = vld [vmem:[#allocation2 + $0x60] sm:$0xf]
    %v102 = vld [vmem:[#allocation2 + $0x64] sm:$0xf]
    %v103 = vld [vmem:[#allocation2 + $0x68] sm:$0xf]
    %v104 = vld [vmem:[#allocation2 + $0x6c] sm:$0xf]
    %v105 = vld [vmem:[#allocation2 + $0x70] sm:$0xf]
    %v106 = vld [vmem:[#allocation2 + $0x74] sm:$0xf]
    %v107 = vld [vmem:[#allocation2 + $0x78] sm:$0xf]
    %v108 = vld [vmem:[#allocation2 + $0x7c] sm:$0xf]
    %v109 = vld [vmem:[#allocation2 + $0x80] sm:$0xf]
    %v110 = vld [vmem:[#allocation2 + $0x84] sm:$0xf]
    %v111 = vld [vmem:[#allocation2 + $0x88] sm:$0xf]
    %v112 = vld [vmem:[#allocation2 + $0x8c] sm:$0xf]
    %v113 = vld [vmem:[#allocation2 + $0x90] sm:$0xf]
    %v114 = vld [vmem:[#allocation2 + $0x94] sm:$0xf]
    %v115 = vld [vmem:[#allocation2 + $0x98] sm:$0xf]
    %v116 = vld [vmem:[#allocation2 + $0x9c] sm:$0xf]
    %v117 = vld [vmem:[#allocation2 + $0xa0] sm:$0xf]
    %v118 = vld [vmem:[#allocation2 + $0xa4] sm:$0xf]
    %v119 = vld [vmem:[#allocation2 + $0xa8] sm:$0xf]
    %v120 = vld [vmem:[#allocation2 + $0xac] sm:$0xf]
    %v121 = vld [vmem:[#allocation2 + $0xb0] sm:$0xf]
    %v122 = vld [vmem:[#allocation2 + $0xb4] sm:$0xf]
    %v123 = vld [vmem:[#allocation2 + $0xb8] sm:$0xf]
    %v124 = vld [vmem:[#allocation2 + $0xbc] sm:$0xf]
    %v125 = vld [vmem:[#allocation2 + $0xc0] sm:$0xf]
    %v126 = vld [vmem:[#allocation2 + $0xc4] sm:$0xf]
    %v127 = vld [vmem:[#allocation2 + $0xc8] sm:$0xf]
    %v128 = vld [vmem:[#allocation2 + $0xcc] sm:$0xf]
    %v129 = vld [vmem:[#allocation2 + $0xd0] sm:$0xf]
    %v130 = vld [vmem:[#allocation2 + $0xd4] sm:$0xf]
    %v131 = vld [vmem:[#allocation2 + $0xd8] sm:$0xf]
    %v132 = vld [vmem:[#allocation2 + $0xdc] sm:$0xf]
    %v133 = vld [vmem:[#allocation2 + $0xe0] sm:$0xf]
    %v134 = vld [vmem:[#allocation2 + $0xe4] sm:$0xf]
    %v135 = vld [vmem:[#allocation2 + $0xe8] sm:$0xf]
    %v136 = vld [vmem:[#allocation2 + $0xec] sm:$0xf]
    %v137 = vld [vmem:[#allocation2 + $0xf0] sm:$0xf]
    %v138 = vld [vmem:[#allocation2 + $0xf4] sm:$0xf]
    %v139 = vld [vmem:[#allocation2 + $0xf8] sm:$0xf]
    %v140 = vld [vmem:[#allocation2 + $0xfc] sm:$0xf]
    %v141 = vld [vmem:[#allocation2 + $0x100] sm:$0xf]
    %v142 = vld [vmem:[#allocation2 + $0x104] sm:$0xf]
    %v143 = vld [vmem:[#allocation2 + $0x108] sm:$0xf]
    %v144 = vld [vmem:[#allocation2 + $0x10c] sm:$0xf]
    %v145 = vld [vmem:[#allocation2 + $0x110] sm:$0xf]
    %v146 = vld [vmem:[#allocation2 + $0x114] sm:$0xf]
    %v147 = vld [vmem:[#allocation2 + $0x118] sm:$0xf]
    %v148 = vld [vmem:[#allocation2 + $0x11c] sm:$0xf]
    %v149 = vld [vmem:[#allocation2 + $0x120] sm:$0xf]
    %v150 = vld [vmem:[#allocation2 + $0x124] sm:$0xf]
    %v151 = vld [vmem:[#allocation2 + $0x128] sm:$0xf]
    %v152 = vld [vmem:[#allocation2 + $0x12c] sm:$0xf]
    %v153 = vld [vmem:[#allocation2 + $0x130] sm:$0xf]
    %v154 = vld [vmem:[#allocation2 + $0x134] sm:$0xf]
    %v155 = vld [vmem:[#allocation2 + $0x138] sm:$0xf]
    %v156 = vld [vmem:[#allocation2 + $0x13c] sm:$0xf]
    %v157 = vld [vmem:[#allocation2 + $0x140] sm:$0xf]
    %v158 = vld [vmem:[#allocation2 + $0x144] sm:$0xf]
    %v159 = vld [vmem:[#allocation2 + $0x148] sm:$0xf]
    %v160 = vld [vmem:[#allocation2 + $0x14c] sm:$0xf]
    %v161 = vld [vmem:[#allocation2 + $0x150] sm:$0xf]
    %v162 = vld [vmem:[#allocation2 + $0x154] sm:$0xf]
    %v163 = vld [vmem:[#allocation2 + $0x158] sm:$0xf]
    %v164 = vld [vmem:[#allocation2 + $0x15c] sm:$0xf]
    %v165 = vld [vmem:[#allocation2 + $0x160] sm:$0xf]
    %v166 = vld [vmem:[#allocation2 + $0x164] sm:$0xf]
    %v167 = vld [vmem:[#allocation2 + $0x168] sm:$0xf]
    %v168 = vld [vmem:[#allocation2 + $0x16c] sm:$0xf]
    %v169 = vld [vmem:[#allocation2 + $0x170] sm:$0xf]
    %v170 = vld [vmem:[#allocation2 + $0x174] sm:$0xf]
    %v171 = vld [vmem:[#allocation2 + $0x178] sm:$0xf]
    %v172 = vld [vmem:[#allocation2 + $0x17c] sm:$0xf]
    %v173 = vld [vmem:[#allocation2 + $0x180] sm:$0xf]
    %v174 = vld [vmem:[#allocation2 + $0x184] sm:$0xf]
    %v175 = vld [vmem:[#allocation2 + $0x188] sm:$0xf]
    %v176 = vld [vmem:[#allocation2 + $0x18c] sm:$0xf]
    %v177 = vld [vmem:[#allocation2 + $0x190] sm:$0xf]
    %v178 = vld [vmem:[#allocation2 + $0x194] sm:$0xf]
    %v179 = vld [vmem:[#allocation2 + $0x198] sm:$0xf]
    %v180 = vld [vmem:[#allocation2 + $0x19c] sm:$0xf]
    %v181 = vld [vmem:[#allocation2 + $0x1a0] sm:$0xf]
    %v182 = vld [vmem:[#allocation2 + $0x1a4] sm:$0xf]
    %v183 = vld [vmem:[#allocation2 + $0x1a8] sm:$0xf]
    %v184 = vld [vmem:[#allocation2 + $0x1ac] sm:$0xf]
    %v185 = vld [vmem:[#allocation2 + $0x1b0] sm:$0xf]
    %v186 = vld [vmem:[#allocation2 + $0x1b4] sm:$0xf]
    %v187 = vld [vmem:[#allocation2 + $0x1b8] sm:$0xf]
    %v188 = vld [vmem:[#allocation2 + $0x1bc] sm:$0xf]
    %v189 = vld [vmem:[#allocation2 + $0x1c0] sm:$0xf]
    %v190 = vld [vmem:[#allocation2 + $0x1c4] sm:$0xf]
    %v191 = vld [vmem:[#allocation2 + $0x1c8] sm:$0xf]
    %v192 = vld [vmem:[#allocation2 + $0x1cc] sm:$0xf]
    %v193 = vld [vmem:[#allocation2 + $0x1d0] sm:$0xf]
    %v194 = vld [vmem:[#allocation2 + $0x1d4] sm:$0xf]
    %v195 = vld [vmem:[#allocation2 + $0x1d8] sm:$0xf]
    %v196 = vld [vmem:[#allocation2 + $0x1dc] sm:$0xf]
    %v197 = vld [vmem:[#allocation2 + $0x1e0] sm:$0xf]
    %v198 = vld [vmem:[#allocation2 + $0x1e4] sm:$0xf]
    %v199 = vld [vmem:[#allocation2 + $0x1e8] sm:$0xf]
    %v200 = vld [vmem:[#allocation2 + $0x1ec] sm:$0xf]
    %v201 = vld [vmem:[#allocation2 + $0x1f0] sm:$0xf]
    %v202 = vld [vmem:[#allocation2 + $0x1f4] sm:$0xf]
    %v203 = vld [vmem:[#allocation2 + $0x1f8] sm:$0xf]
    %v204 = vld [vmem:[#allocation2 + $0x1fc] sm:$0xf]
    %v205 = vld [vmem:[%s2] sm:$0x1]
    %v207 = vlaneseq
    %v208 = vshrl.u32 %v207, 7
    %v209 = vsub.s32 0, %v208
    %v210 = vrot.slane %v205, %v209
    %v216 = vunpack.c.l.b16 %v73
    %v217 = vunpack.c.h.b16 %v73
    %v218 = vunpack.c.l.b16 %v74
    %v219 = vunpack.c.h.b16 %v74
    %v220 = vunpack.c.l.b16 %v75
    %v221 = vunpack.c.h.b16 %v75
    %v222 = vunpack.c.l.b16 %v76
    %v223 = vunpack.c.h.b16 %v76
    %v224 = vpack.c.b16 %v216, %v216
    %v225 = vpack.c.b16 %v217, %v217
    %v226 = vpack.c.b16 %v218, %v218
    %v227 = vpack.c.b16 %v219, %v219
    %v228 = vpack.c.b16 %v220, %v220
    %v229 = vpack.c.b16 %v221, %v221
    %v230 = vpack.c.b16 %v222, %v222
    %v231 = vpack.c.b16 %v223, %v223
    %v368 = vunpack.c.l.b16 %v77
    %v369 = vunpack.c.l.b16 %v78
    %v370 = vunpack.c.l.b16 %v79
    %v371 = vunpack.c.l.b16 %v80
    %v372 = vunpack.c.l.b16 %v81
    %v373 = vunpack.c.l.b16 %v82
    %v374 = vunpack.c.l.b16 %v83
    %v375 = vunpack.c.l.b16 %v84
    %v376 = vunpack.c.l.b16 %v85
    %v377 = vunpack.c.l.b16 %v86
    %v378 = vunpack.c.l.b16 %v87
    %v379 = vunpack.c.l.b16 %v88
    %v380 = vunpack.c.l.b16 %v89
    %v381 = vunpack.c.l.b16 %v90
    %v382 = vunpack.c.l.b16 %v91
    %v383 = vunpack.c.l.b16 %v92
    %v384 = vunpack.c.l.b16 %v93
    %v385 = vunpack.c.l.b16 %v94
    %v386 = vunpack.c.l.b16 %v95
    %v387 = vunpack.c.l.b16 %v96
    %v388 = vunpack.c.l.b16 %v97
    %v389 = vunpack.c.l.b16 %v98
    %v390 = vunpack.c.l.b16 %v99
    %v391 = vunpack.c.l.b16 %v100
    %v392 = vunpack.c.l.b16 %v101
    %v393 = vunpack.c.l.b16 %v102
    %v394 = vunpack.c.l.b16 %v103
    %v395 = vunpack.c.l.b16 %v104
    %v396 = vunpack.c.l.b16 %v105
    %v397 = vunpack.c.l.b16 %v106
    %v398 = vunpack.c.l.b16 %v107
    %v399 = vunpack.c.l.b16 %v108
    %v400 = vunpack.c.l.b16 %v109
    %v401 = vunpack.c.l.b16 %v110
    %v402 = vunpack.c.l.b16 %v111
    %v403 = vunpack.c.l.b16 %v112
    %v404 = vunpack.c.l.b16 %v113
    %v405 = vunpack.c.l.b16 %v114
    %v406 = vunpack.c.l.b16 %v115
    %v407 = vunpack.c.l.b16 %v116
    %v408 = vunpack.c.l.b16 %v117
    %v409 = vunpack.c.l.b16 %v118
    %v410 = vunpack.c.l.b16 %v119
    %v411 = vunpack.c.l.b16 %v120
    %v412 = vunpack.c.l.b16 %v121
    %v413 = vunpack.c.l.b16 %v122
    %v414 = vunpack.c.l.b16 %v123
    %v415 = vunpack.c.l.b16 %v124
    %v416 = vunpack.c.l.b16 %v125
    %v417 = vunpack.c.l.b16 %v126
    %v418 = vunpack.c.l.b16 %v127
    %v419 = vunpack.c.l.b16 %v128
    %v420 = vunpack.c.l.b16 %v129
    %v421 = vunpack.c.l.b16 %v130
    %v422 = vunpack.c.l.b16 %v131
    %v423 = vunpack.c.l.b16 %v132
    %v424 = vunpack.c.l.b16 %v133
    %v425 = vunpack.c.l.b16 %v134
    %v426 = vunpack.c.l.b16 %v135
    %v427 = vunpack.c.l.b16 %v136
    %v428 = vunpack.c.l.b16 %v137
    %v429 = vunpack.c.l.b16 %v138
    %v430 = vunpack.c.l.b16 %v139
    %v431 = vunpack.c.l.b16 %v140
    %v432 = vunpack.c.l.b16 %v141
    %v433 = vunpack.c.l.b16 %v142
    %v434 = vunpack.c.l.b16 %v143
    %v435 = vunpack.c.l.b16 %v144
    %v436 = vunpack.c.l.b16 %v145
    %v437 = vunpack.c.l.b16 %v146
    %v438 = vunpack.c.l.b16 %v147
    %v439 = vunpack.c.l.b16 %v148
    %v440 = vunpack.c.l.b16 %v149
    %v441 = vunpack.c.l.b16 %v150
    %v442 = vunpack.c.l.b16 %v151
    %v443 = vunpack.c.l.b16 %v152
    %v444 = vunpack.c.l.b16 %v153
    %v445 = vunpack.c.l.b16 %v154
    %v446 = vunpack.c.l.b16 %v155
    %v447 = vunpack.c.l.b16 %v156
    %v448 = vunpack.c.l.b16 %v157
    %v449 = vunpack.c.l.b16 %v158
    %v450 = vunpack.c.l.b16 %v159
    %v451 = vunpack.c.l.b16 %v160
    %v452 = vunpack.c.l.b16 %v161
    %v453 = vunpack.c.l.b16 %v162
    %v454 = vunpack.c.l.b16 %v163
    %v455 = vunpack.c.l.b16 %v164
    %v456 = vunpack.c.l.b16 %v165
    %v457 = vunpack.c.l.b16 %v166
    %v458 = vunpack.c.l.b16 %v167
    %v459 = vunpack.c.l.b16 %v168
    %v460 = vunpack.c.l.b16 %v169
    %v461 = vunpack.c.l.b16 %v170
    %v462 = vunpack.c.l.b16 %v171
    %v463 = vunpack.c.l.b16 %v172
    %v464 = vunpack.c.l.b16 %v173
    %v465 = vunpack.c.l.b16 %v174
    %v466 = vunpack.c.l.b16 %v175
    %v467 = vunpack.c.l.b16 %v176
    %v468 = vunpack.c.l.b16 %v177
    %v469 = vunpack.c.l.b16 %v178
    %v470 = vunpack.c.l.b16 %v179
    %v471 = vunpack.c.l.b16 %v180
    %v472 = vunpack.c.l.b16 %v181
    %v473 = vunpack.c.l.b16 %v182
    %v474 = vunpack.c.l.b16 %v183
    %v475 = vunpack.c.l.b16 %v184
    %v476 = vunpack.c.l.b16 %v185
    %v477 = vunpack.c.l.b16 %v186
    %v478 = vunpack.c.l.b16 %v187
    %v479 = vunpack.c.l.b16 %v188
    %v480 = vunpack.c.l.b16 %v189
    %v481 = vunpack.c.l.b16 %v190
    %v482 = vunpack.c.l.b16 %v191
    %v483 = vunpack.c.l.b16 %v192
    %v484 = vunpack.c.l.b16 %v193
    %v485 = vunpack.c.l.b16 %v194
    %v486 = vunpack.c.l.b16 %v195
    %v487 = vunpack.c.l.b16 %v196
    %v488 = vunpack.c.l.b16 %v197
    %v489 = vunpack.c.l.b16 %v198
    %v490 = vunpack.c.l.b16 %v199
    %v491 = vunpack.c.l.b16 %v200
    %v492 = vunpack.c.l.b16 %v201
    %v493 = vunpack.c.l.b16 %v202
    %v494 = vunpack.c.l.b16 %v203
    %v495 = vunpack.c.l.b16 %v204
    %v496 = vpack.c.b16 %v369, %v368
    %v497 = vpack.c.b16 %v371, %v370
    %v498 = vpack.c.b16 %v373, %v372
    %v499 = vpack.c.b16 %v375, %v374
    %v500 = vpack.c.b16 %v377, %v376
    %v501 = vpack.c.b16 %v379, %v378
    %v502 = vpack.c.b16 %v381, %v380
    %v503 = vpack.c.b16 %v383, %v382
    %v504 = vpack.c.b16 %v385, %v384
    %v505 = vpack.c.b16 %v387, %v386
    %v506 = vpack.c.b16 %v389, %v388
    %v507 = vpack.c.b16 %v391, %v390
    %v508 = vpack.c.b16 %v393, %v392
    %v509 = vpack.c.b16 %v395, %v394
    %v510 = vpack.c.b16 %v397, %v396
    %v511 = vpack.c.b16 %v399, %v398
    %v512 = vpack.c.b16 %v401, %v400
    %v513 = vpack.c.b16 %v403, %v402
    %v514 = vpack.c.b16 %v405, %v404
    %v515 = vpack.c.b16 %v407, %v406
    %v516 = vpack.c.b16 %v409, %v408
    %v517 = vpack.c.b16 %v411, %v410
    %v518 = vpack.c.b16 %v413, %v412
    %v519 = vpack.c.b16 %v415, %v414
    %v520 = vpack.c.b16 %v417, %v416
    %v521 = vpack.c.b16 %v419, %v418
    %v522 = vpack.c.b16 %v421, %v420
    %v523 = vpack.c.b16 %v423, %v422
    %v524 = vpack.c.b16 %v425, %v424
    %v525 = vpack.c.b16 %v427, %v426
    %v526 = vpack.c.b16 %v429, %v428
    %v527 = vpack.c.b16 %v431, %v430
    %v528 = vpack.c.b16 %v433, %v432
    %v529 = vpack.c.b16 %v435, %v434
    %v530 = vpack.c.b16 %v437, %v436
    %v531 = vpack.c.b16 %v439, %v438
    %v532 = vpack.c.b16 %v441, %v440
    %v533 = vpack.c.b16 %v443, %v442
    %v534 = vpack.c.b16 %v445, %v444
    %v535 = vpack.c.b16 %v447, %v446
    %v536 = vpack.c.b16 %v449, %v448
    %v537 = vpack.c.b16 %v451, %v450
    %v538 = vpack.c.b16 %v453, %v452
    %v539 = vpack.c.b16 %v455, %v454
    %v540 = vpack.c.b16 %v457, %v456
    %v541 = vpack.c.b16 %v459, %v458
    %v542 = vpack.c.b16 %v461, %v460
    %v543 = vpack.c.b16 %v463, %v462
    %v544 = vpack.c.b16 %v465, %v464
    %v545 = vpack.c.b16 %v467, %v466
    %v546 = vpack.c.b16 %v469, %v468
    %v547 = vpack.c.b16 %v471, %v470
    %v548 = vpack.c.b16 %v473, %v472
    %v549 = vpack.c.b16 %v475, %v474
    %v550 = vpack.c.b16 %v477, %v476
    %v551 = vpack.c.b16 %v479, %v478
    %v552 = vpack.c.b16 %v481, %v480
    %v553 = vpack.c.b16 %v483, %v482
    %v554 = vpack.c.b16 %v485, %v484
    %v555 = vpack.c.b16 %v487, %v486
    %v556 = vpack.c.b16 %v489, %v488
    %v557 = vpack.c.b16 %v491, %v490
    %v558 = vpack.c.b16 %v493, %v492
    %v559 = vpack.c.b16 %v495, %v494
    %624 = vmatprep.subr.bf16.mxu0 0
    %625 = vmatpush1.bf16.msra.mxu0 %v496
    %626 = vmatprep.subr.bf16.mxu0 0
    %627 = vmatpush1.bf16.msra.mxu0 %v497
    %628 = vmatprep.subr.bf16.mxu0 0
    %629 = vmatpush1.bf16.msra.mxu0 %v498
    %630 = vmatprep.subr.bf16.mxu0 0
    %631 = vmatpush1.bf16.msra.mxu0 %v499
    %632 = vmatprep.subr.bf16.mxu0 0
    %633 = vmatpush1.bf16.msra.mxu0 %v500
    %634 = vmatprep.subr.bf16.mxu0 0
    %635 = vmatpush1.bf16.msra.mxu0 %v501
    %636 = vmatprep.subr.bf16.mxu0 0
    %637 = vmatpush1.bf16.msra.mxu0 %v502
    %638 = vmatprep.subr.bf16.mxu0 0
    %639 = vmatpush1.bf16.msra.mxu0 %v503
    %640 = vmatprep.subr.bf16.mxu0 0
    %641 = vmatpush1.bf16.msra.mxu0 %v504
    %642 = vmatprep.subr.bf16.mxu0 0
    %643 = vmatpush1.bf16.msra.mxu0 %v505
    %644 = vmatprep.subr.bf16.mxu0 0
    %645 = vmatpush1.bf16.msra.mxu0 %v506
    %646 = vmatprep.subr.bf16.mxu0 0
    %647 = vmatpush1.bf16.msra.mxu0 %v507
    %648 = vmatprep.subr.bf16.mxu0 0
    %649 = vmatpush1.bf16.msra.mxu0 %v508
    %650 = vmatprep.subr.bf16.mxu0 0
    %651 = vmatpush1.bf16.msra.mxu0 %v509
    %652 = vmatprep.subr.bf16.mxu0 0
    %653 = vmatpush1.bf16.msra.mxu0 %v510
    %654 = vmatprep.subr.bf16.mxu0 0
    %655 = vmatpush1.bf16.msra.mxu0 %v511
    %656 = vmatprep.mubr.bf16.mxu0 %v225
    %657 = vmatmul.mubr.bf16.gmra.mrb[0].mxu0 %v224
    %v658 = vpop.f32.mrb[0].mxu0
    %v659 = vadd.f32 %v210, %v658
    %v660 = vpop.f32.mrb[0].mxu0
    %v661 = vpop.f32.mrb[0].mxu0
    %v662 = vpop.f32.mrb[0].mxu0
    %663 = vdwg.mxu0
    %664 = vmatprep.subr.bf16.mxu0 0
    %665 = vmatpush1.bf16.msra.mxu0 %v512
    %666 = vmatprep.subr.bf16.mxu0 0
    %667 = vmatpush1.bf16.msra.mxu0 %v513
    %668 = vmatprep.subr.bf16.mxu0 0
    %669 = vmatpush1.bf16.msra.mxu0 %v514
    %670 = vmatprep.subr.bf16.mxu0 0
    %671 = vmatpush1.bf16.msra.mxu0 %v515
    %672 = vmatprep.subr.bf16.mxu0 0
    %673 = vmatpush1.bf16.msra.mxu0 %v516
    %674 = vmatprep.subr.bf16.mxu0 0
    %675 = vmatpush1.bf16.msra.mxu0 %v517
    %676 = vmatprep.subr.bf16.mxu0 0
    %677 = vmatpush1.bf16.msra.mxu0 %v518
    %678 = vmatprep.subr.bf16.mxu0 0
    %679 = vmatpush1.bf16.msra.mxu0 %v519
    %680 = vmatprep.subr.bf16.mxu0 0
    %681 = vmatpush1.bf16.msra.mxu0 %v520
    %682 = vmatprep.subr.bf16.mxu0 0
    %683 = vmatpush1.bf16.msra.mxu0 %v521
    %684 = vmatprep.subr.bf16.mxu0 0
    %685 = vmatpush1.bf16.msra.mxu0 %v522
    %686 = vmatprep.subr.bf16.mxu0 0
    %687 = vmatpush1.bf16.msra.mxu0 %v523
    %688 = vmatprep.subr.bf16.mxu0 0
    %689 = vmatpush1.bf16.msra.mxu0 %v524
    %690 = vmatprep.subr.bf16.mxu0 0
    %691 = vmatpush1.bf16.msra.mxu0 %v525
    %692 = vmatprep.subr.bf16.mxu0 0
    %693 = vmatpush1.bf16.msra.mxu0 %v526
    %694 = vmatprep.subr.bf16.mxu0 0
    %695 = vmatpush1.bf16.msra.mxu0 %v527
    %696 = vmatprep.mubr.bf16.mxu0 %v227
    %697 = vmatmul.mubr.bf16.gmra.mrb[0].mxu0 %v226
    %v698 = vpop.f32.mrb[0].mxu0
    %v699 = vadd.f32 %v659, %v698
    %v700 = vpop.f32.mrb[0].mxu0
    %v701 = vpop.f32.mrb[0].mxu0
    %v702 = vpop.f32.mrb[0].mxu0
    %703 = vdwg.mxu0
    %704 = vmatprep.subr.bf16.mxu0 0
    %705 = vmatpush1.bf16.msra.mxu0 %v528
    %706 = vmatprep.subr.bf16.mxu0 0
    %707 = vmatpush1.bf16.msra.mxu0 %v529
    %708 = vmatprep.subr.bf16.mxu0 0
    %709 = vmatpush1.bf16.msra.mxu0 %v530
    %710 = vmatprep.subr.bf16.mxu0 0
    %711 = vmatpush1.bf16.msra.mxu0 %v531
    %712 = vmatprep.subr.bf16.mxu0 0
    %713 = vmatpush1.bf16.msra.mxu0 %v532
    %714 = vmatprep.subr.bf16.mxu0 0
    %715 = vmatpush1.bf16.msra.mxu0 %v533
    %716 = vmatprep.subr.bf16.mxu0 0
    %717 = vmatpush1.bf16.msra.mxu0 %v534
    %718 = vmatprep.subr.bf16.mxu0 0
    %719 = vmatpush1.bf16.msra.mxu0 %v535
    %720 = vmatprep.subr.bf16.mxu0 0
    %721 = vmatpush1.bf16.msra.mxu0 %v536
    %722 = vmatprep.subr.bf16.mxu0 0
    %723 = vmatpush1.bf16.msra.mxu0 %v537
    %724 = vmatprep.subr.bf16.mxu0 0
    %725 = vmatpush1.bf16.msra.mxu0 %v538
    %726 = vmatprep.subr.bf16.mxu0 0
    %727 = vmatpush1.bf16.msra.mxu0 %v539
    %728 = vmatprep.subr.bf16.mxu0 0
    %729 = vmatpush1.bf16.msra.mxu0 %v540
    %730 = vmatprep.subr.bf16.mxu0 0
    %731 = vmatpush1.bf16.msra.mxu0 %v541
    %732 = vmatprep.subr.bf16.mxu0 0
    %733 = vmatpush1.bf16.msra.mxu0 %v542
    %734 = vmatprep.subr.bf16.mxu0 0
    %735 = vmatpush1.bf16.msra.mxu0 %v543
    %736 = vmatprep.mubr.bf16.mxu0 %v229
    %737 = vmatmul.mubr.bf16.gmra.mrb[0].mxu0 %v228
    %v738 = vpop.f32.mrb[0].mxu0
    %v739 = vadd.f32 %v699, %v738
    %v740 = vpop.f32.mrb[0].mxu0
    %v741 = vpop.f32.mrb[0].mxu0
    %v742 = vpop.f32.mrb[0].mxu0
    %743 = vdwg.mxu0
    %744 = vmatprep.subr.bf16.mxu0 0
    %745 = vmatpush1.bf16.msra.mxu0 %v544
    %746 = vmatprep.subr.bf16.mxu0 0
    %747 = vmatpush1.bf16.msra.mxu0 %v545
    %748 = vmatprep.subr.bf16.mxu0 0
    %749 = vmatpush1.bf16.msra.mxu0 %v546
    %750 = vmatprep.subr.bf16.mxu0 0
    %751 = vmatpush1.bf16.msra.mxu0 %v547
    %752 = vmatprep.subr.bf16.mxu0 0
    %753 = vmatpush1.bf16.msra.mxu0 %v548
    %754 = vmatprep.subr.bf16.mxu0 0
    %755 = vmatpush1.bf16.msra.mxu0 %v549
    %756 = vmatprep.subr.bf16.mxu0 0
    %757 = vmatpush1.bf16.msra.mxu0 %v550
    %758 = vmatprep.subr.bf16.mxu0 0
    %759 = vmatpush1.bf16.msra.mxu0 %v551
    %760 = vmatprep.subr.bf16.mxu0 0
    %761 = vmatpush1.bf16.msra.mxu0 %v552
    %762 = vmatprep.subr.bf16.mxu0 0
    %763 = vmatpush1.bf16.msra.mxu0 %v553
    %764 = vmatprep.subr.bf16.mxu0 0
    %765 = vmatpush1.bf16.msra.mxu0 %v554
    %766 = vmatprep.subr.bf16.mxu0 0
    %767 = vmatpush1.bf16.msra.mxu0 %v555
    %768 = vmatprep.subr.bf16.mxu0 0
    %769 = vmatpush1.bf16.msra.mxu0 %v556
    %770 = vmatprep.subr.bf16.mxu0 0
    %771 = vmatpush1.bf16.msra.mxu0 %v557
    %772 = vmatprep.subr.bf16.mxu0 0
    %773 = vmatpush1.bf16.msra.mxu0 %v558
    %774 = vmatprep.subr.bf16.mxu0 0
    %775 = vmatpush1.bf16.msra.mxu0 %v559
    %776 = vmatprep.mubr.bf16.mxu0 %v231
    %777 = vmatmul.mubr.bf16.gmra.mrb[0].mxu0 %v230
    %v778 = vpop.f32.mrb[0].mxu0
    %v779 = vadd.f32 %v739, %v778
    %v780 = vpop.f32.mrb[0].mxu0
    %v781 = vpop.f32.mrb[0].mxu0
    %v782 = vpop.f32.mrb[0].mxu0
    %783 = vdwg.mxu0
    %v784 = vmul.f32 %v779, 0.2
    %v785 = vmax.f32 %v779, %v784
    %v786 = vpack.c.bf16 %v785, %v785
    %v787 = vld [vmem:[%s3] sm:$0xf]
    %v788 = vld [vmem:[%s3 + $0x4] sm:$0xf]
    %v789 = vld [vmem:[%s3 + $0x8] sm:$0xf]
    %v790 = vld [vmem:[%s3 + $0xc] sm:$0xf]
    %v791 = vld [vmem:[%s3 + $0x10] sm:$0xf]
    %v792 = vld [vmem:[%s3 + $0x14] sm:$0xf]
    %v793 = vld [vmem:[%s3 + $0x18] sm:$0xf]
    %v794 = vld [vmem:[%s3 + $0x1c] sm:$0xf]
    %v795 = vld [vmem:[%s3 + $0x20] sm:$0xf]
    %v796 = vld [vmem:[%s3 + $0x24] sm:$0xf]
    %v797 = vld [vmem:[%s3 + $0x28] sm:$0xf]
    %v798 = vld [vmem:[%s3 + $0x2c] sm:$0xf]
    %v799 = vld [vmem:[%s3 + $0x30] sm:$0xf]
    %v800 = vld [vmem:[%s3 + $0x34] sm:$0xf]
    %v801 = vld [vmem:[%s3 + $0x38] sm:$0xf]
    %v802 = vld [vmem:[%s3 + $0x3c] sm:$0xf]
    %v803 = vld [vmem:[%s4] sm:$0x1]
    %v805 = vlaneseq
    %v806 = vshrl.u32 %v805, 7
    %v807 = vsub.s32 0, %v806
    %v808 = vrot.slane %v803, %v807
    %v826 = vunpack.c.l.b16 %v787
    %v827 = vunpack.c.l.b16 %v788
    %v828 = vunpack.c.l.b16 %v789
    %v829 = vunpack.c.l.b16 %v790
    %v830 = vunpack.c.l.b16 %v791
    %v831 = vunpack.c.l.b16 %v792
    %v832 = vunpack.c.l.b16 %v793
    %v833 = vunpack.c.l.b16 %v794
    %v834 = vunpack.c.l.b16 %v795
    %v835 = vunpack.c.l.b16 %v796
    %v836 = vunpack.c.l.b16 %v797
    %v837 = vunpack.c.l.b16 %v798
    %v838 = vunpack.c.l.b16 %v799
    %v839 = vunpack.c.l.b16 %v800
    %v840 = vunpack.c.l.b16 %v801
    %v841 = vunpack.c.l.b16 %v802
    %v842 = vpack.c.b16 %v827, %v826
    %v843 = vpack.c.b16 %v829, %v828
    %v844 = vpack.c.b16 %v831, %v830
    %v845 = vpack.c.b16 %v833, %v832
    %v846 = vpack.c.b16 %v835, %v834
    %v847 = vpack.c.b16 %v837, %v836
    %v848 = vpack.c.b16 %v839, %v838
    %v849 = vpack.c.b16 %v841, %v840
    %858 = vmatprep.subr.bf16.mxu0 0
    %859 = vmatpush1.bf16.msra.mxu0 %v842
    %860 = vmatprep.subr.bf16.mxu0 0
    %861 = vmatpush1.bf16.msra.mxu0 %v843
    %862 = vmatprep.subr.bf16.mxu0 0
    %863 = vmatpush1.bf16.msra.mxu0 %v844
    %864 = vmatprep.subr.bf16.mxu0 0
    %865 = vmatpush1.bf16.msra.mxu0 %v845
    %866 = vmatprep.subr.bf16.mxu0 0
    %867 = vmatpush1.bf16.msra.mxu0 %v846
    %868 = vmatprep.subr.bf16.mxu0 0
    %869 = vmatpush1.bf16.msra.mxu0 %v847
    %870 = vmatprep.subr.bf16.mxu0 0
    %871 = vmatpush1.bf16.msra.mxu0 %v848
    %872 = vmatprep.subr.bf16.mxu0 0
    %873 = vmatpush1.bf16.msra.mxu0 %v849
    %874 = vmatprep.subr.bf16.mxu0 0
    %875 = vmatpush1.bf16.msra.mxu0 0
    %876 = vmatprep.subr.bf16.mxu0 0
    %877 = vmatpush1.bf16.msra.mxu0 0
    %878 = vmatprep.subr.bf16.mxu0 0
    %879 = vmatpush1.bf16.msra.mxu0 0
    %880 = vmatprep.subr.bf16.mxu0 0
    %881 = vmatpush1.bf16.msra.mxu0 0
    %882 = vmatprep.subr.bf16.mxu0 0
    %883 = vmatpush1.bf16.msra.mxu0 0
    %884 = vmatprep.subr.bf16.mxu0 0
    %885 = vmatpush1.bf16.msra.mxu0 0
    %886 = vmatprep.subr.bf16.mxu0 0
    %887 = vmatpush1.bf16.msra.mxu0 0
    %888 = vmatprep.subr.bf16.mxu0 0
    %889 = vmatpush1.bf16.msra.mxu0 0
    %890 = vmatprep.mubr.bf16.mxu0 0
    %891 = vmatmul.mubr.bf16.gmra.mrb[0].mxu0 %v786
    %v892 = vpop.f32.mrb[0].mxu0
    %v893 = vadd.f32 %v808, %v892
    %v894 = vpop.f32.mrb[0].mxu0
    %v895 = vpop.f32.mrb[0].mxu0
    %v896 = vpop.f32.mrb[0].mxu0
    %897 = vdwg.mxu0
    %v898 = vmul.f32 %v893, 0.2
    %v899 = vmax.f32 %v893, %v898
    %v900 = vpack.c.bf16 %v899, %v899
    %v901 = vld [vmem:[%s5] sm:$0xf]
    %v902 = vld [vmem:[%s5 + $0x4] sm:$0xf]
    %v903 = vld [vmem:[%s5 + $0x8] sm:$0xf]
    %v904 = vld [vmem:[%s5 + $0xc] sm:$0xf]
    %v905 = vld [vmem:[%s5 + $0x10] sm:$0xf]
    %v906 = vld [vmem:[%s5 + $0x14] sm:$0xf]
    %v907 = vld [vmem:[%s5 + $0x18] sm:$0xf]
    %v908 = vld [vmem:[%s5 + $0x1c] sm:$0xf]
    %v909 = vld [vmem:[%s5 + $0x20] sm:$0xf]
    %v910 = vld [vmem:[%s5 + $0x24] sm:$0xf]
    %v911 = vld [vmem:[%s5 + $0x28] sm:$0xf]
    %v912 = vld [vmem:[%s5 + $0x2c] sm:$0xf]
    %v913 = vld [vmem:[%s5 + $0x30] sm:$0xf]
    %v914 = vld [vmem:[%s5 + $0x34] sm:$0xf]
    %v915 = vld [vmem:[%s5 + $0x38] sm:$0xf]
    %v916 = vld [vmem:[%s5 + $0x3c] sm:$0xf]
    %v917 = vld [vmem:[%s6] sm:$0x1]
    %v919 = vlaneseq
    %v920 = vshrl.u32 %v919, 7
    %v921 = vsub.s32 0, %v920
    %v922 = vrot.slane %v917, %v921
    %v940 = vunpack.c.l.b16 %v901
    %v941 = vunpack.c.l.b16 %v902
    %v942 = vunpack.c.l.b16 %v903
    %v943 = vunpack.c.l.b16 %v904
    %v944 = vunpack.c.l.b16 %v905
    %v945 = vunpack.c.l.b16 %v906
    %v946 = vunpack.c.l.b16 %v907
    %v947 = vunpack.c.l.b16 %v908
    %v948 = vunpack.c.l.b16 %v909
    %v949 = vunpack.c.l.b16 %v910
    %v950 = vunpack.c.l.b16 %v911
    %v951 = vunpack.c.l.b16 %v912
    %v952 = vunpack.c.l.b16 %v913
    %v953 = vunpack.c.l.b16 %v914
    %v954 = vunpack.c.l.b16 %v915
    %v955 = vunpack.c.l.b16 %v916
    %v956 = vpack.c.b16 %v941, %v940
    %v957 = vpack.c.b16 %v943, %v942
    %v958 = vpack.c.b16 %v945, %v944
    %v959 = vpack.c.b16 %v947, %v946
    %v960 = vpack.c.b16 %v949, %v948
    %v961 = vpack.c.b16 %v951, %v950
    %v962 = vpack.c.b16 %v953, %v952
    %v963 = vpack.c.b16 %v955, %v954
    %972 = vmatprep.subr.bf16.mxu0 0
    %973 = vmatpush1.bf16.msra.mxu0 %v956
    %974 = vmatprep.subr.bf16.mxu0 0
    %975 = vmatpush1.bf16.msra.mxu0 %v957
    %976 = vmatprep.subr.bf16.mxu0 0
    %977 = vmatpush1.bf16.msra.mxu0 %v958
    %978 = vmatprep.subr.bf16.mxu0 0
    %979 = vmatpush1.bf16.msra.mxu0 %v959
    %980 = vmatprep.subr.bf16.mxu0 0
    %981 = vmatpush1.bf16.msra.mxu0 %v960
    %982 = vmatprep.subr.bf16.mxu0 0
    %983 = vmatpush1.bf16.msra.mxu0 %v961
    %984 = vmatprep.subr.bf16.mxu0 0
    %985 = vmatpush1.bf16.msra.mxu0 %v962
    %986 = vmatprep.subr.bf16.mxu0 0
    %987 = vmatpush1.bf16.msra.mxu0 %v963
    %988 = vmatprep.subr.bf16.mxu0 0
    %989 = vmatpush1.bf16.msra.mxu0 0
    %990 = vmatprep.subr.bf16.mxu0 0
    %991 = vmatpush1.bf16.msra.mxu0 0
    %992 = vmatprep.subr.bf16.mxu0 0
    %993 = vmatpush1.bf16.msra.mxu0 0
    %994 = vmatprep.subr.bf16.mxu0 0
    %995 = vmatpush1.bf16.msra.mxu0 0
    %996 = vmatprep.subr.bf16.mxu0 0
    %997 = vmatpush1.bf16.msra.mxu0 0
    %998 = vmatprep.subr.bf16.mxu0 0
    %999 = vmatpush1.bf16.msra.mxu0 0
    %1000 = vmatprep.subr.bf16.mxu0 0
    %1001 = vmatpush1.bf16.msra.mxu0 0
    %1002 = vmatprep.subr.bf16.mxu0 0
    %1003 = vmatpush1.bf16.msra.mxu0 0
    %1004 = vmatprep.mubr.bf16.mxu0 0
    %1005 = vmatmul.mubr.bf16.gmra.mrb[0].mxu0 %v900
    %v1006 = vpop.f32.mrb[0].mxu0
    %v1007 = vadd.f32 %v922, %v1006
    %v1008 = vpop.f32.mrb[0].mxu0
    %v1009 = vpop.f32.mrb[0].mxu0
    %v1010 = vpop.f32.mrb[0].mxu0
    %1011 = vdwg.mxu0
    %v1012 = vpack.c.bf16 %v1007, %v1007
    %v1013 = vld [vmem:[%s7] sm:$0xf]
    %v1014 = vld [vmem:[%s7 + $0x4] sm:$0xf]
    %v1015 = vld [vmem:[%s7 + $0x8] sm:$0xf]
    %v1016 = vld [vmem:[%s7 + $0xc] sm:$0xf]
    %v1017 = vld [vmem:[%s7 + $0x10] sm:$0xf]
    %v1018 = vld [vmem:[%s7 + $0x14] sm:$0xf]
    %v1019 = vld [vmem:[%s7 + $0x18] sm:$0xf]
    %v1020 = vld [vmem:[%s7 + $0x1c] sm:$0xf]
    %v1021 = vld [vmem:[%s7 + $0x20] sm:$0xf]
    %v1022 = vld [vmem:[%s7 + $0x24] sm:$0xf]
    %v1023 = vld [vmem:[%s7 + $0x28] sm:$0xf]
    %v1024 = vld [vmem:[%s7 + $0x2c] sm:$0xf]
    %v1025 = vld [vmem:[%s7 + $0x30] sm:$0xf]
    %v1026 = vld [vmem:[%s7 + $0x34] sm:$0xf]
    %v1027 = vld [vmem:[%s7 + $0x38] sm:$0xf]
    %v1028 = vld [vmem:[%s7 + $0x3c] sm:$0xf]
    %v1029 = vld [vmem:[%s8] sm:$0x1]
    %v1031 = vlaneseq
    %v1032 = vshrl.u32 %v1031, 7
    %v1033 = vsub.s32 0, %v1032
    %v1034 = vrot.slane %v1029, %v1033
    %v1052 = vunpack.c.l.b16 %v1013
    %v1053 = vunpack.c.l.b16 %v1014
    %v1054 = vunpack.c.l.b16 %v1015
    %v1055 = vunpack.c.l.b16 %v1016
    %v1056 = vunpack.c.l.b16 %v1017
    %v1057 = vunpack.c.l.b16 %v1018
    %v1058 = vunpack.c.l.b16 %v1019
    %v1059 = vunpack.c.l.b16 %v1020
    %v1060 = vunpack.c.l.b16 %v1021
    %v1061 = vunpack.c.l.b16 %v1022
    %v1062 = vunpack.c.l.b16 %v1023
    %v1063 = vunpack.c.l.b16 %v1024
    %v1064 = vunpack.c.l.b16 %v1025
    %v1065 = vunpack.c.l.b16 %v1026
    %v1066 = vunpack.c.l.b16 %v1027
    %v1067 = vunpack.c.l.b16 %v1028
    %v1068 = vpack.c.b16 %v1053, %v1052
    %v1069 = vpack.c.b16 %v1055, %v1054
    %v1070 = vpack.c.b16 %v1057, %v1056
    %v1071 = vpack.c.b16 %v1059, %v1058
    %v1072 = vpack.c.b16 %v1061, %v1060
    %v1073 = vpack.c.b16 %v1063, %v1062
    %v1074 = vpack.c.b16 %v1065, %v1064
    %v1075 = vpack.c.b16 %v1067, %v1066
    %1084 = vmatprep.subr.bf16.mxu0 0
    %1085 = vmatpush1.bf16.msra.mxu0 %v1068
    %1086 = vmatprep.subr.bf16.mxu0 0
    %1087 = vmatpush1.bf16.msra.mxu0 %v1069
    %1088 = vmatprep.subr.bf16.mxu0 0
    %1089 = vmatpush1.bf16.msra.mxu0 %v1070
    %1090 = vmatprep.subr.bf16.mxu0 0
    %1091 = vmatpush1.bf16.msra.mxu0 %v1071
    %1092 = vmatprep.subr.bf16.mxu0 0
    %1093 = vmatpush1.bf16.msra.mxu0 %v1072
    %1094 = vmatprep.subr.bf16.mxu0 0
    %1095 = vmatpush1.bf16.msra.mxu0 %v1073
    %1096 = vmatprep.subr.bf16.mxu0 0
    %1097 = vmatpush1.bf16.msra.mxu0 %v1074
    %1098 = vmatprep.subr.bf16.mxu0 0
    %1099 = vmatpush1.bf16.msra.mxu0 %v1075
    %1100 = vmatprep.subr.bf16.mxu0 0
    %1101 = vmatpush1.bf16.msra.mxu0 0
    %1102 = vmatprep.subr.bf16.mxu0 0
    %1103 = vmatpush1.bf16.msra.mxu0 0
    %1104 = vmatprep.subr.bf16.mxu0 0
    %1105 = vmatpush1.bf16.msra.mxu0 0
    %1106 = vmatprep.subr.bf16.mxu0 0
    %1107 = vmatpush1.bf16.msra.mxu0 0
    %1108 = vmatprep.subr.bf16.mxu0 0
    %1109 = vmatpush1.bf16.msra.mxu0 0
    %1110 = vmatprep.subr.bf16.mxu0 0
    %1111 = vmatpush1.bf16.msra.mxu0 0
    %1112 = vmatprep.subr.bf16.mxu0 0
    %1113 = vmatpush1.bf16.msra.mxu0 0
    %1114 = vmatprep.subr.bf16.mxu0 0
    %1115 = vmatpush1.bf16.msra.mxu0 0
    %1116 = vmatprep.mubr.bf16.mxu0 0
    %1117 = vmatmul.mubr.bf16.gmra.mrb[0].mxu0 %v1012
    %v1118 = vpop.f32.mrb[0].mxu0
    %v1119 = vadd.f32 %v1034, %v1118
    %v1120 = vpop.f32.mrb[0].mxu0
    %v1121 = vpop.f32.mrb[0].mxu0
    %v1122 = vpop.f32.mrb[0].mxu0
    %1123 = vdwg.mxu0
    %v1124 = vmul.f32 %v1119, 0.2
    %v1125 = vmax.f32 %v1119, %v1124
    %v1126 = vpack.c.bf16 %v1125, %v1125
    %v1127 = vld [vmem:[%s9] sm:$0xf]
    %v1128 = vld [vmem:[%s9 + $0x4] sm:$0xf]
    %v1129 = vld [vmem:[%s9 + $0x8] sm:$0xf]
    %v1130 = vld [vmem:[%s9 + $0xc] sm:$0xf]
    %v1131 = vld [vmem:[%s9 + $0x10] sm:$0xf]
    %v1132 = vld [vmem:[%s9 + $0x14] sm:$0xf]
    %v1133 = vld [vmem:[%s9 + $0x18] sm:$0xf]
    %v1134 = vld [vmem:[%s9 + $0x1c] sm:$0xf]
    %v1135 = vld [vmem:[%s9 + $0x20] sm:$0xf]
    %v1136 = vld [vmem:[%s9 + $0x24] sm:$0xf]
    %v1137 = vld [vmem:[%s9 + $0x28] sm:$0xf]
    %v1138 = vld [vmem:[%s9 + $0x2c] sm:$0xf]
    %v1139 = vld [vmem:[%s9 + $0x30] sm:$0xf]
    %v1140 = vld [vmem:[%s9 + $0x34] sm:$0xf]
    %v1141 = vld [vmem:[%s9 + $0x38] sm:$0xf]
    %v1142 = vld [vmem:[%s9 + $0x3c] sm:$0xf]
    %v1143 = vld [vmem:[%s10] sm:$0x1]
    %v1145 = vlaneseq
    %v1146 = vshrl.u32 %v1145, 7
    %v1147 = vsub.s32 0, %v1146
    %v1148 = vrot.slane %v1143, %v1147
    %v1166 = vunpack.c.l.b16 %v1127
    %v1167 = vunpack.c.l.b16 %v1128
    %v1168 = vunpack.c.l.b16 %v1129
    %v1169 = vunpack.c.l.b16 %v1130
    %v1170 = vunpack.c.l.b16 %v1131
    %v1171 = vunpack.c.l.b16 %v1132
    %v1172 = vunpack.c.l.b16 %v1133
    %v1173 = vunpack.c.l.b16 %v1134
    %v1174 = vunpack.c.l.b16 %v1135
    %v1175 = vunpack.c.l.b16 %v1136
    %v1176 = vunpack.c.l.b16 %v1137
    %v1177 = vunpack.c.l.b16 %v1138
    %v1178 = vunpack.c.l.b16 %v1139
    %v1179 = vunpack.c.l.b16 %v1140
    %v1180 = vunpack.c.l.b16 %v1141
    %v1181 = vunpack.c.l.b16 %v1142
    %v1182 = vpack.c.b16 %v1167, %v1166
    %v1183 = vpack.c.b16 %v1169, %v1168
    %v1184 = vpack.c.b16 %v1171, %v1170
    %v1185 = vpack.c.b16 %v1173, %v1172
    %v1186 = vpack.c.b16 %v1175, %v1174
    %v1187 = vpack.c.b16 %v1177, %v1176
    %v1188 = vpack.c.b16 %v1179, %v1178
    %v1189 = vpack.c.b16 %v1181, %v1180
    %1198 = vmatprep.subr.bf16.mxu0 0
    %1199 = vmatpush1.bf16.msra.mxu0 %v1182
    %1200 = vmatprep.subr.bf16.mxu0 0
    %1201 = vmatpush1.bf16.msra.mxu0 %v1183
    %1202 = vmatprep.subr.bf16.mxu0 0
    %1203 = vmatpush1.bf16.msra.mxu0 %v1184
    %1204 = vmatprep.subr.bf16.mxu0 0
    %1205 = vmatpush1.bf16.msra.mxu0 %v1185
    %1206 = vmatprep.subr.bf16.mxu0 0
    %1207 = vmatpush1.bf16.msra.mxu0 %v1186
    %1208 = vmatprep.subr.bf16.mxu0 0
    %1209 = vmatpush1.bf16.msra.mxu0 %v1187
    %1210 = vmatprep.subr.bf16.mxu0 0
    %1211 = vmatpush1.bf16.msra.mxu0 %v1188
    %1212 = vmatprep.subr.bf16.mxu0 0
    %1213 = vmatpush1.bf16.msra.mxu0 %v1189
    %1214 = vmatprep.subr.bf16.mxu0 0
    %1215 = vmatpush1.bf16.msra.mxu0 0
    %1216 = vmatprep.subr.bf16.mxu0 0
    %1217 = vmatpush1.bf16.msra.mxu0 0
    %1218 = vmatprep.subr.bf16.mxu0 0
    %1219 = vmatpush1.bf16.msra.mxu0 0
    %1220 = vmatprep.subr.bf16.mxu0 0
    %1221 = vmatpush1.bf16.msra.mxu0 0
    %1222 = vmatprep.subr.bf16.mxu0 0
    %1223 = vmatpush1.bf16.msra.mxu0 0
    %1224 = vmatprep.subr.bf16.mxu0 0
    %1225 = vmatpush1.bf16.msra.mxu0 0
    %1226 = vmatprep.subr.bf16.mxu0 0
    %1227 = vmatpush1.bf16.msra.mxu0 0
    %1228 = vmatprep.subr.bf16.mxu0 0
    %1229 = vmatpush1.bf16.msra.mxu0 0
    %1230 = vmatprep.mubr.bf16.mxu0 0
    %1231 = vmatmul.mubr.bf16.gmra.mrb[0].mxu0 %v1126
    %v1232 = vpop.f32.mrb[0].mxu0
    %v1233 = vadd.f32 %v1148, %v1232
    %v1234 = vpop.f32.mrb[0].mxu0
    %v1235 = vpop.f32.mrb[0].mxu0
    %v1236 = vpop.f32.mrb[0].mxu0
    %1237 = vdwg.mxu0
    %v1238 = vmul.f32 %v1233, 0.2
    %v1239 = vmax.f32 %v1233, %v1238
    %v1240 = vpack.c.bf16 %v1239, %v1239
    %v1241 = vld [vmem:[#allocation4] sm:$0xff]
    %v1242 = vld [vmem:[#allocation4 + $0x8] sm:$0xff]
    %v1243 = vld [vmem:[#allocation4 + $0x10] sm:$0xff]
    %v1244 = vld [vmem:[#allocation4 + $0x18] sm:$0xff]
    %v1245 = vld [vmem:[#allocation4 + $0x20] sm:$0xff]
    %v1246 = vld [vmem:[#allocation4 + $0x28] sm:$0xff]
    %v1247 = vld [vmem:[#allocation4 + $0x30] sm:$0xff]
    %v1248 = vld [vmem:[#allocation4 + $0x38] sm:$0xff]
    %v1249 = vld [vmem:[#allocation4 + $0x40] sm:$0xff]
    %v1250 = vld [vmem:[#allocation4 + $0x48] sm:$0xff]
    %v1251 = vld [vmem:[#allocation4 + $0x50] sm:$0xff]
    %v1252 = vld [vmem:[#allocation4 + $0x58] sm:$0xff]
    %v1253 = vld [vmem:[#allocation4 + $0x60] sm:$0xff]
    %v1254 = vld [vmem:[#allocation4 + $0x68] sm:$0xff]
    %v1255 = vld [vmem:[#allocation4 + $0x70] sm:$0xff]
    %v1256 = vld [vmem:[#allocation4 + $0x78] sm:$0xff]
    %v1257 = vld [vmem:[#allocation4 + $0x80] sm:$0xff]
    %v1258 = vld [vmem:[#allocation4 + $0x88] sm:$0xff]
    %v1259 = vld [vmem:[#allocation4 + $0x90] sm:$0xff]
    %v1260 = vld [vmem:[#allocation4 + $0x98] sm:$0xff]
    %v1261 = vld [vmem:[#allocation4 + $0xa0] sm:$0xff]
    %v1262 = vld [vmem:[#allocation4 + $0xa8] sm:$0xff]
    %v1263 = vld [vmem:[#allocation4 + $0xb0] sm:$0xff]
    %v1264 = vld [vmem:[#allocation4 + $0xb8] sm:$0xff]
    %v1265 = vld [vmem:[#allocation4 + $0xc0] sm:$0xff]
    %v1266 = vld [vmem:[#allocation4 + $0xc8] sm:$0xff]
    %v1267 = vld [vmem:[#allocation4 + $0xd0] sm:$0xff]
    %v1268 = vld [vmem:[#allocation4 + $0xd8] sm:$0xff]
    %v1269 = vld [vmem:[#allocation4 + $0xe0] sm:$0xff]
    %v1270 = vld [vmem:[#allocation4 + $0xe8] sm:$0xff]
    %v1271 = vld [vmem:[#allocation4 + $0xf0] sm:$0xff]
    %v1272 = vld [vmem:[#allocation4 + $0xf8] sm:$0xff]
    %v1273 = vld [vmem:[#allocation4 + $0x100] sm:$0xff]
    %v1274 = vld [vmem:[#allocation4 + $0x108] sm:$0xff]
    %v1275 = vld [vmem:[#allocation4 + $0x110] sm:$0xff]
    %v1276 = vld [vmem:[#allocation4 + $0x118] sm:$0xff]
    %v1277 = vld [vmem:[#allocation4 + $0x120] sm:$0xff]
    %v1278 = vld [vmem:[#allocation4 + $0x128] sm:$0xff]
    %v1279 = vld [vmem:[#allocation4 + $0x130] sm:$0xff]
    %v1280 = vld [vmem:[#allocation4 + $0x138] sm:$0xff]
    %v1281 = vld [vmem:[#allocation4 + $0x140] sm:$0xff]
    %v1282 = vld [vmem:[#allocation4 + $0x148] sm:$0xff]
    %v1283 = vld [vmem:[#allocation4 + $0x150] sm:$0xff]
    %v1284 = vld [vmem:[#allocation4 + $0x158] sm:$0xff]
    %v1285 = vld [vmem:[#allocation4 + $0x160] sm:$0xff]
    %v1286 = vld [vmem:[#allocation4 + $0x168] sm:$0xff]
    %v1287 = vld [vmem:[#allocation4 + $0x170] sm:$0xff]
    %v1288 = vld [vmem:[#allocation4 + $0x178] sm:$0xff]
    %v1289 = vld [vmem:[#allocation4 + $0x180] sm:$0xff]
    %v1290 = vld [vmem:[#allocation4 + $0x188] sm:$0xff]
    %v1291 = vld [vmem:[#allocation4 + $0x190] sm:$0xff]
    %v1292 = vld [vmem:[#allocation4 + $0x198] sm:$0xff]
    %v1293 = vld [vmem:[#allocation4 + $0x1a0] sm:$0xff]
    %v1294 = vld [vmem:[#allocation4 + $0x1a8] sm:$0xff]
    %v1295 = vld [vmem:[#allocation4 + $0x1b0] sm:$0xff]
    %v1296 = vld [vmem:[#allocation4 + $0x1b8] sm:$0xff]
    %v1297 = vld [vmem:[#allocation4 + $0x1c0] sm:$0xff]
    %v1298 = vld [vmem:[#allocation4 + $0x1c8] sm:$0xff]
    %v1299 = vld [vmem:[#allocation4 + $0x1d0] sm:$0xff]
    %v1300 = vld [vmem:[#allocation4 + $0x1d8] sm:$0xff]
    %v1301 = vld [vmem:[#allocation4 + $0x1e0] sm:$0xff]
    %v1302 = vld [vmem:[#allocation4 + $0x1e8] sm:$0xff]
    %v1303 = vld [vmem:[#allocation4 + $0x1f0] sm:$0xff]
    %v1304 = vld [vmem:[#allocation4 + $0x1f8] sm:$0xff]
    %v1305 = vld [vmem:[%s12] sm:$0xff]
    %v1307 = vlaneseq
    %v1308 = vshrl.u32 %v1307, 7
    %v1309 = vsub.s32 0, %v1308
    %v1310 = vrot.slane %v1305, %v1309
    %v1311 = vlaneseq
    %v1312 = vshrl.u32 %v1311, 7
    %v1313 = vsub.s32 1, %v1312
    %v1314 = vrot.slane %v1305, %v1313
    %v1315 = vlaneseq
    %v1316 = vshrl.u32 %v1315, 7
    %v1317 = vsub.s32 2, %v1316
    %v1318 = vrot.slane %v1305, %v1317
    %v1319 = vlaneseq
    %v1320 = vshrl.u32 %v1319, 7
    %v1321 = vsub.s32 3, %v1320
    %v1322 = vrot.slane %v1305, %v1321
    %v1323 = vlaneseq
    %v1324 = vshrl.u32 %v1323, 7
    %v1325 = vsub.s32 4, %v1324
    %v1326 = vrot.slane %v1305, %v1325
    %v1327 = vlaneseq
    %v1328 = vshrl.u32 %v1327, 7
    %v1329 = vsub.s32 5, %v1328
    %v1330 = vrot.slane %v1305, %v1329
    %v1331 = vlaneseq
    %v1332 = vshrl.u32 %v1331, 7
    %v1333 = vsub.s32 6, %v1332
    %v1334 = vrot.slane %v1305, %v1333
    %v1335 = vlaneseq
    %v1336 = vshrl.u32 %v1335, 7
    %v1337 = vsub.s32 7, %v1336
    %v1338 = vrot.slane %v1305, %v1337
    %v1411 = vunpack.c.l.b16 %v1241
    %v1412 = vunpack.c.h.b16 %v1241
    %v1413 = vunpack.c.l.b16 %v1242
    %v1414 = vunpack.c.h.b16 %v1242
    %v1415 = vunpack.c.l.b16 %v1243
    %v1416 = vunpack.c.h.b16 %v1243
    %v1417 = vunpack.c.l.b16 %v1244
    %v1418 = vunpack.c.h.b16 %v1244
    %v1419 = vunpack.c.l.b16 %v1245
    %v1420 = vunpack.c.h.b16 %v1245
    %v1421 = vunpack.c.l.b16 %v1246
    %v1422 = vunpack.c.h.b16 %v1246
    %v1423 = vunpack.c.l.b16 %v1247
    %v1424 = vunpack.c.h.b16 %v1247
    %v1425 = vunpack.c.l.b16 %v1248
    %v1426 = vunpack.c.h.b16 %v1248
    %v1427 = vunpack.c.l.b16 %v1249
    %v1428 = vunpack.c.h.b16 %v1249
    %v1429 = vunpack.c.l.b16 %v1250
    %v1430 = vunpack.c.h.b16 %v1250
    %v1431 = vunpack.c.l.b16 %v1251
    %v1432 = vunpack.c.h.b16 %v1251
    %v1433 = vunpack.c.l.b16 %v1252
    %v1434 = vunpack.c.h.b16 %v1252
    %v1435 = vunpack.c.l.b16 %v1253
    %v1436 = vunpack.c.h.b16 %v1253
    %v1437 = vunpack.c.l.b16 %v1254
    %v1438 = vunpack.c.h.b16 %v1254
    %v1439 = vunpack.c.l.b16 %v1255
    %v1440 = vunpack.c.h.b16 %v1255
    %v1441 = vunpack.c.l.b16 %v1256
    %v1442 = vunpack.c.h.b16 %v1256
    %v1443 = vunpack.c.l.b16 %v1257
    %v1444 = vunpack.c.h.b16 %v1257
    %v1445 = vunpack.c.l.b16 %v1258
    %v1446 = vunpack.c.h.b16 %v1258
    %v1447 = vunpack.c.l.b16 %v1259
    %v1448 = vunpack.c.h.b16 %v1259
    %v1449 = vunpack.c.l.b16 %v1260
    %v1450 = vunpack.c.h.b16 %v1260
    %v1451 = vunpack.c.l.b16 %v1261
    %v1452 = vunpack.c.h.b16 %v1261
    %v1453 = vunpack.c.l.b16 %v1262
    %v1454 = vunpack.c.h.b16 %v1262
    %v1455 = vunpack.c.l.b16 %v1263
    %v1456 = vunpack.c.h.b16 %v1263
    %v1457 = vunpack.c.l.b16 %v1264
    %v1458 = vunpack.c.h.b16 %v1264
    %v1459 = vunpack.c.l.b16 %v1265
    %v1460 = vunpack.c.h.b16 %v1265
    %v1461 = vunpack.c.l.b16 %v1266
    %v1462 = vunpack.c.h.b16 %v1266
    %v1463 = vunpack.c.l.b16 %v1267
    %v1464 = vunpack.c.h.b16 %v1267
    %v1465 = vunpack.c.l.b16 %v1268
    %v1466 = vunpack.c.h.b16 %v1268
    %v1467 = vunpack.c.l.b16 %v1269
    %v1468 = vunpack.c.h.b16 %v1269
    %v1469 = vunpack.c.l.b16 %v1270
    %v1470 = vunpack.c.h.b16 %v1270
    %v1471 = vunpack.c.l.b16 %v1271
    %v1472 = vunpack.c.h.b16 %v1271
    %v1473 = vunpack.c.l.b16 %v1272
    %v1474 = vunpack.c.h.b16 %v1272
    %v1475 = vunpack.c.l.b16 %v1273
    %v1476 = vunpack.c.h.b16 %v1273
    %v1477 = vunpack.c.l.b16 %v1274
    %v1478 = vunpack.c.h.b16 %v1274
    %v1479 = vunpack.c.l.b16 %v1275
    %v1480 = vunpack.c.h.b16 %v1275
    %v1481 = vunpack.c.l.b16 %v1276
    %v1482 = vunpack.c.h.b16 %v1276
    %v1483 = vunpack.c.l.b16 %v1277
    %v1484 = vunpack.c.h.b16 %v1277
    %v1485 = vunpack.c.l.b16 %v1278
    %v1486 = vunpack.c.h.b16 %v1278
    %v1487 = vunpack.c.l.b16 %v1279
    %v1488 = vunpack.c.h.b16 %v1279
    %v1489 = vunpack.c.l.b16 %v1280
    %v1490 = vunpack.c.h.b16 %v1280
    %v1491 = vunpack.c.l.b16 %v1281
    %v1492 = vunpack.c.h.b16 %v1281
    %v1493 = vunpack.c.l.b16 %v1282
    %v1494 = vunpack.c.h.b16 %v1282
    %v1495 = vunpack.c.l.b16 %v1283
    %v1496 = vunpack.c.h.b16 %v1283
    %v1497 = vunpack.c.l.b16 %v1284
    %v1498 = vunpack.c.h.b16 %v1284
    %v1499 = vunpack.c.l.b16 %v1285
    %v1500 = vunpack.c.h.b16 %v1285
    %v1501 = vunpack.c.l.b16 %v1286
    %v1502 = vunpack.c.h.b16 %v1286
    %v1503 = vunpack.c.l.b16 %v1287
    %v1504 = vunpack.c.h.b16 %v1287
    %v1505 = vunpack.c.l.b16 %v1288
    %v1506 = vunpack.c.h.b16 %v1288
    %v1507 = vunpack.c.l.b16 %v1289
    %v1508 = vunpack.c.h.b16 %v1289
    %v1509 = vunpack.c.l.b16 %v1290
    %v1510 = vunpack.c.h.b16 %v1290
    %v1511 = vunpack.c.l.b16 %v1291
    %v1512 = vunpack.c.h.b16 %v1291
    %v1513 = vunpack.c.l.b16 %v1292
    %v1514 = vunpack.c.h.b16 %v1292
    %v1515 = vunpack.c.l.b16 %v1293
    %v1516 = vunpack.c.h.b16 %v1293
    %v1517 = vunpack.c.l.b16 %v1294
    %v1518 = vunpack.c.h.b16 %v1294
    %v1519 = vunpack.c.l.b16 %v1295
    %v1520 = vunpack.c.h.b16 %v1295
    %v1521 = vunpack.c.l.b16 %v1296
    %v1522 = vunpack.c.h.b16 %v1296
    %v1523 = vunpack.c.l.b16 %v1297
    %v1524 = vunpack.c.h.b16 %v1297
    %v1525 = vunpack.c.l.b16 %v1298
    %v1526 = vunpack.c.h.b16 %v1298
    %v1527 = vunpack.c.l.b16 %v1299
    %v1528 = vunpack.c.h.b16 %v1299
    %v1529 = vunpack.c.l.b16 %v1300
    %v1530 = vunpack.c.h.b16 %v1300
    %v1531 = vunpack.c.l.b16 %v1301
    %v1532 = vunpack.c.h.b16 %v1301
    %v1533 = vunpack.c.l.b16 %v1302
    %v1534 = vunpack.c.h.b16 %v1302
    %v1535 = vunpack.c.l.b16 %v1303
    %v1536 = vunpack.c.h.b16 %v1303
    %v1537 = vunpack.c.l.b16 %v1304
    %v1538 = vunpack.c.h.b16 %v1304
    %v1539 = vpack.c.b16 %v1419, %v1411
    %v1540 = vpack.c.b16 %v1420, %v1412
    %v1541 = vpack.c.b16 %v1421, %v1413
    %v1542 = vpack.c.b16 %v1422, %v1414
    %v1543 = vpack.c.b16 %v1423, %v1415
    %v1544 = vpack.c.b16 %v1424, %v1416
    %v1545 = vpack.c.b16 %v1425, %v1417
    %v1546 = vpack.c.b16 %v1426, %v1418
    %v1547 = vpack.c.b16 %v1435, %v1427
    %v1548 = vpack.c.b16 %v1436, %v1428
    %v1549 = vpack.c.b16 %v1437, %v1429
    %v1550 = vpack.c.b16 %v1438, %v1430
    %v1551 = vpack.c.b16 %v1439, %v1431
    %v1552 = vpack.c.b16 %v1440, %v1432
    %v1553 = vpack.c.b16 %v1441, %v1433
    %v1554 = vpack.c.b16 %v1442, %v1434
    %v1555 = vpack.c.b16 %v1451, %v1443
    %v1556 = vpack.c.b16 %v1452, %v1444
    %v1557 = vpack.c.b16 %v1453, %v1445
    %v1558 = vpack.c.b16 %v1454, %v1446
    %v1559 = vpack.c.b16 %v1455, %v1447
    %v1560 = vpack.c.b16 %v1456, %v1448
    %v1561 = vpack.c.b16 %v1457, %v1449
    %v1562 = vpack.c.b16 %v1458, %v1450
    %v1563 = vpack.c.b16 %v1467, %v1459
    %v1564 = vpack.c.b16 %v1468, %v1460
    %v1565 = vpack.c.b16 %v1469, %v1461
    %v1566 = vpack.c.b16 %v1470, %v1462
    %v1567 = vpack.c.b16 %v1471, %v1463
    %v1568 = vpack.c.b16 %v1472, %v1464
    %v1569 = vpack.c.b16 %v1473, %v1465
    %v1570 = vpack.c.b16 %v1474, %v1466
    %v1571 = vpack.c.b16 %v1483, %v1475
    %v1572 = vpack.c.b16 %v1484, %v1476
    %v1573 = vpack.c.b16 %v1485, %v1477
    %v1574 = vpack.c.b16 %v1486, %v1478
    %v1575 = vpack.c.b16 %v1487, %v1479
    %v1576 = vpack.c.b16 %v1488, %v1480
    %v1577 = vpack.c.b16 %v1489, %v1481
    %v1578 = vpack.c.b16 %v1490, %v1482
    %v1579 = vpack.c.b16 %v1499, %v1491
    %v1580 = vpack.c.b16 %v1500, %v1492
    %v1581 = vpack.c.b16 %v1501, %v1493
    %v1582 = vpack.c.b16 %v1502, %v1494
    %v1583 = vpack.c.b16 %v1503, %v1495
    %v1584 = vpack.c.b16 %v1504, %v1496
    %v1585 = vpack.c.b16 %v1505, %v1497
    %v1586 = vpack.c.b16 %v1506, %v1498
    %v1587 = vpack.c.b16 %v1515, %v1507
    %v1588 = vpack.c.b16 %v1516, %v1508
    %v1589 = vpack.c.b16 %v1517, %v1509
    %v1590 = vpack.c.b16 %v1518, %v1510
    %v1591 = vpack.c.b16 %v1519, %v1511
    %v1592 = vpack.c.b16 %v1520, %v1512
    %v1593 = vpack.c.b16 %v1521, %v1513
    %v1594 = vpack.c.b16 %v1522, %v1514
    %v1595 = vpack.c.b16 %v1531, %v1523
    %v1596 = vpack.c.b16 %v1532, %v1524
    %v1597 = vpack.c.b16 %v1533, %v1525
    %v1598 = vpack.c.b16 %v1534, %v1526
    %v1599 = vpack.c.b16 %v1535, %v1527
    %v1600 = vpack.c.b16 %v1536, %v1528
    %v1601 = vpack.c.b16 %v1537, %v1529
    %v1602 = vpack.c.b16 %v1538, %v1530
    %1667 = vmatprep.subr.bf16.mxu0 %v1540
    %1668 = vmatpush1.bf16.msra.mxu0 %v1539
    %1669 = vmatprep.subr.bf16.mxu0 %v1548
    %1670 = vmatpush1.bf16.msra.mxu0 %v1547
    %1671 = vmatprep.subr.bf16.mxu0 %v1556
    %1672 = vmatpush1.bf16.msra.mxu0 %v1555
    %1673 = vmatprep.subr.bf16.mxu0 %v1564
    %1674 = vmatpush1.bf16.msra.mxu0 %v1563
    %1675 = vmatprep.subr.bf16.mxu0 %v1572
    %1676 = vmatpush1.bf16.msra.mxu0 %v1571
    %1677 = vmatprep.subr.bf16.mxu0 %v1580
    %1678 = vmatpush1.bf16.msra.mxu0 %v1579
    %1679 = vmatprep.subr.bf16.mxu0 %v1588
    %1680 = vmatpush1.bf16.msra.mxu0 %v1587
    %1681 = vmatprep.subr.bf16.mxu0 %v1596
    %1682 = vmatpush1.bf16.msra.mxu0 %v1595
    %1683 = vmatprep.subr.bf16.mxu0 0
    %1684 = vmatpush1.bf16.msra.mxu0 0
    %1685 = vmatprep.subr.bf16.mxu0 0
    %1686 = vmatpush1.bf16.msra.mxu0 0
    %1687 = vmatprep.subr.bf16.mxu0 0
    %1688 = vmatpush1.bf16.msra.mxu0 0
    %1689 = vmatprep.subr.bf16.mxu0 0
    %1690 = vmatpush1.bf16.msra.mxu0 0
    %1691 = vmatprep.subr.bf16.mxu0 0
    %1692 = vmatpush1.bf16.msra.mxu0 0
    %1693 = vmatprep.subr.bf16.mxu0 0
    %1694 = vmatpush1.bf16.msra.mxu0 0
    %1695 = vmatprep.subr.bf16.mxu0 0
    %1696 = vmatpush1.bf16.msra.mxu0 0
    %1697 = vmatprep.subr.bf16.mxu0 0
    %1698 = vmatpush1.bf16.msra.mxu0 0
    %1699 = vmatprep.mubr.bf16.mxu0 0
    %1700 = vmatmul.mubr.bf16.gmra.mrb[0].mxu0 %v1240
    %v1701 = vpop.f32.mrb[0].mxu0
    %v1702 = vadd.f32 %v1310, %v1701
    %v1703 = vpop.f32.mrb[0].mxu0
    %v1704 = vadd.f32 %v1314, %v1703
    %v1705 = vpop.f32.mrb[0].mxu0
    %v1706 = vpop.f32.mrb[0].mxu0
    %1707 = vdwg.mxu0
    %1708 = vmatprep.subr.bf16.mxu0 %v1542
    %1709 = vmatpush1.bf16.msra.mxu0 %v1541
    %1710 = vmatprep.subr.bf16.mxu0 %v1550
    %1711 = vmatpush1.bf16.msra.mxu0 %v1549
    %1712 = vmatprep.subr.bf16.mxu0 %v1558
    %1713 = vmatpush1.bf16.msra.mxu0 %v1557
    %1714 = vmatprep.subr.bf16.mxu0 %v1566
    %1715 = vmatpush1.bf16.msra.mxu0 %v1565
    %1716 = vmatprep.subr.bf16.mxu0 %v1574
    %1717 = vmatpush1.bf16.msra.mxu0 %v1573
    %1718 = vmatprep.subr.bf16.mxu0 %v1582
    %1719 = vmatpush1.bf16.msra.mxu0 %v1581
    %1720 = vmatprep.subr.bf16.mxu0 %v1590
    %1721 = vmatpush1.bf16.msra.mxu0 %v1589
    %1722 = vmatprep.subr.bf16.mxu0 %v1598
    %1723 = vmatpush1.bf16.msra.mxu0 %v1597
    %1724 = vmatprep.subr.bf16.mxu0 0
    %1725 = vmatpush1.bf16.msra.mxu0 0
    %1726 = vmatprep.subr.bf16.mxu0 0
    %1727 = vmatpush1.bf16.msra.mxu0 0
    %1728 = vmatprep.subr.bf16.mxu0 0
    %1729 = vmatpush1.bf16.msra.mxu0 0
    %1730 = vmatprep.subr.bf16.mxu0 0
    %1731 = vmatpush1.bf16.msra.mxu0 0
    %1732 = vmatprep.subr.bf16.mxu0 0
    %1733 = vmatpush1.bf16.msra.mxu0 0
    %1734 = vmatprep.subr.bf16.mxu0 0
    %1735 = vmatpush1.bf16.msra.mxu0 0
    %1736 = vmatprep.subr.bf16.mxu0 0
    %1737 = vmatpush1.bf16.msra.mxu0 0
    %1738 = vmatprep.subr.bf16.mxu0 0
    %1739 = vmatpush1.bf16.msra.mxu0 0
    %1740 = vmatprep.mubr.bf16.mxu0 0
    %1741 = vmatmul.mubr.bf16.gmra.mrb[0].mxu0 %v1240
    %v1742 = vpop.f32.mrb[0].mxu0
    %v1743 = vadd.f32 %v1318, %v1742
    %v1744 = vpop.f32.mrb[0].mxu0
    %v1745 = vadd.f32 %v1322, %v1744
    %v1746 = vpop.f32.mrb[0].mxu0
    %v1747 = vpop.f32.mrb[0].mxu0
    %1748 = vdwg.mxu0
    %1749 = vmatprep.subr.bf16.mxu0 %v1544
    %1750 = vmatpush1.bf16.msra.mxu0 %v1543
    %1751 = vmatprep.subr.bf16.mxu0 %v1552
    %1752 = vmatpush1.bf16.msra.mxu0 %v1551
    %1753 = vmatprep.subr.bf16.mxu0 %v1560
    %1754 = vmatpush1.bf16.msra.mxu0 %v1559
    %1755 = vmatprep.subr.bf16.mxu0 %v1568
    %1756 = vmatpush1.bf16.msra.mxu0 %v1567
    %1757 = vmatprep.subr.bf16.mxu0 %v1576
    %1758 = vmatpush1.bf16.msra.mxu0 %v1575
    %1759 = vmatprep.subr.bf16.mxu0 %v1584
    %1760 = vmatpush1.bf16.msra.mxu0 %v1583
    %1761 = vmatprep.subr.bf16.mxu0 %v1592
    %1762 = vmatpush1.bf16.msra.mxu0 %v1591
    %1763 = vmatprep.subr.bf16.mxu0 %v1600
    %1764 = vmatpush1.bf16.msra.mxu0 %v1599
    %1765 = vmatprep.subr.bf16.mxu0 0
    %1766 = vmatpush1.bf16.msra.mxu0 0
    %1767 = vmatprep.subr.bf16.mxu0 0
    %1768 = vmatpush1.bf16.msra.mxu0 0
    %1769 = vmatprep.subr.bf16.mxu0 0
    %1770 = vmatpush1.bf16.msra.mxu0 0
    %1771 = vmatprep.subr.bf16.mxu0 0
    %1772 = vmatpush1.bf16.msra.mxu0 0
    %1773 = vmatprep.subr.bf16.mxu0 0
    %1774 = vmatpush1.bf16.msra.mxu0 0
    %1775 = vmatprep.subr.bf16.mxu0 0
    %1776 = vmatpush1.bf16.msra.mxu0 0
    %1777 = vmatprep.subr.bf16.mxu0 0
    %1778 = vmatpush1.bf16.msra.mxu0 0
    %1779 = vmatprep.subr.bf16.mxu0 0
    %1780 = vmatpush1.bf16.msra.mxu0 0
    %1781 = vmatprep.mubr.bf16.mxu0 0
    %1782 = vmatmul.mubr.bf16.gmra.mrb[0].mxu0 %v1240
    %v1783 = vpop.f32.mrb[0].mxu0
    %v1784 = vadd.f32 %v1326, %v1783
    %v1785 = vpop.f32.mrb[0].mxu0
    %v1786 = vadd.f32 %v1330, %v1785
    %v1787 = vpop.f32.mrb[0].mxu0
    %v1788 = vpop.f32.mrb[0].mxu0
    %1789 = vdwg.mxu0
    %1790 = vmatprep.subr.bf16.mxu0 %v1546
    %1791 = vmatpush1.bf16.msra.mxu0 %v1545
    %1792 = vmatprep.subr.bf16.mxu0 %v1554
    %1793 = vmatpush1.bf16.msra.mxu0 %v1553
    %1794 = vmatprep.subr.bf16.mxu0 %v1562
    %1795 = vmatpush1.bf16.msra.mxu0 %v1561
    %1796 = vmatprep.subr.bf16.mxu0 %v1570
    %1797 = vmatpush1.bf16.msra.mxu0 %v1569
    %1798 = vmatprep.subr.bf16.mxu0 %v1578
    %1799 = vmatpush1.bf16.msra.mxu0 %v1577
    %1800 = vmatprep.subr.bf16.mxu0 %v1586
    %1801 = vmatpush1.bf16.msra.mxu0 %v1585
    %1802 = vmatprep.subr.bf16.mxu0 %v1594
    %1803 = vmatpush1.bf16.msra.mxu0 %v1593
    %1804 = vmatprep.subr.bf16.mxu0 %v1602
    %1805 = vmatpush1.bf16.msra.mxu0 %v1601
    %1806 = vmatprep.subr.bf16.mxu0 0
    %1807 = vmatpush1.bf16.msra.mxu0 0
    %1808 = vmatprep.subr.bf16.mxu0 0
    %1809 = vmatpush1.bf16.msra.mxu0 0
    %1810 = vmatprep.subr.bf16.mxu0 0
    %1811 = vmatpush1.bf16.msra.mxu0 0
    %1812 = vmatprep.subr.bf16.mxu0 0
    %1813 = vmatpush1.bf16.msra.mxu0 0
    %1814 = vmatprep.subr.bf16.mxu0 0
    %1815 = vmatpush1.bf16.msra.mxu0 0
    %1816 = vmatprep.subr.bf16.mxu0 0
    %1817 = vmatpush1.bf16.msra.mxu0 0
    %1818 = vmatprep.subr.bf16.mxu0 0
    %1819 = vmatpush1.bf16.msra.mxu0 0
    %1820 = vmatprep.subr.bf16.mxu0 0
    %1821 = vmatpush1.bf16.msra.mxu0 0
    %1822 = vmatprep.mubr.bf16.mxu0 0
    %1823 = vmatmul.mubr.bf16.gmra.mrb[0].mxu0 %v1240
    %v1824 = vpop.f32.mrb[0].mxu0
    %v1825 = vadd.f32 %v1334, %v1824
    %v1826 = vpop.f32.mrb[0].mxu0
    %v1827 = vadd.f32 %v1338, %v1826
    %v1828 = vpop.f32.mrb[0].mxu0
    %v1829 = vpop.f32.mrb[0].mxu0
    %1830 = vdwg.mxu0
    %v1831 = vsub.f32 0.0, %v1702
    %v1832 = vsub.f32 0.0, %v1704
    %v1833 = vsub.f32 0.0, %v1743
    %v1834 = vsub.f32 0.0, %v1745
    %v1835 = vsub.f32 0.0, %v1784
    %v1836 = vsub.f32 0.0, %v1786
    %v1837 = vsub.f32 0.0, %v1825
    %v1838 = vsub.f32 0.0, %v1827
    %v1839 = vmul.f32 %v1831, 1.442695
    %v1840 = vpow.pop %v1839
    %v1841 = vmul.f32 %v1832, 1.442695
    %v1842 = vpow.pop %v1841
    %v1843 = vmul.f32 %v1833, 1.442695
    %v1844 = vpow.pop %v1843
    %v1845 = vmul.f32 %v1834, 1.442695
    %v1846 = vpow.pop %v1845
    %v1847 = vmul.f32 %v1835, 1.442695
    %v1848 = vpow.pop %v1847
    %v1849 = vmul.f32 %v1836, 1.442695
    %v1850 = vpow.pop %v1849
    %v1851 = vmul.f32 %v1837, 1.442695
    %v1852 = vpow.pop %v1851
    %v1853 = vmul.f32 %v1838, 1.442695
    %v1854 = vpow.pop %v1853
    %v1855 = vadd.f32 %v1840, 1.0
    %v1856 = vadd.f32 %v1842, 1.0
    %v1857 = vadd.f32 %v1844, 1.0
    %v1858 = vadd.f32 %v1846, 1.0
    %v1859 = vadd.f32 %v1848, 1.0
    %v1860 = vadd.f32 %v1850, 1.0
    %v1861 = vadd.f32 %v1852, 1.0
    %v1862 = vadd.f32 %v1854, 1.0
    %v1863 = vrcp.pop %v1855
    %v1864 = vrcp.pop %v1856
    %v1865 = vrcp.pop %v1857
    %v1866 = vrcp.pop %v1858
    %v1867 = vrcp.pop %v1859
    %v1868 = vrcp.pop %v1860
    %v1869 = vrcp.pop %v1861
    %v1870 = vrcp.pop %v1862
    %1871 = vst [vmem:[%s13] sm:$0xff] %v1863
    %1872 = vst [vmem:[%s13 + $0x8] sm:$0xff] %v1864
    %1873 = vst [vmem:[%s13 + $0x10] sm:$0xff] %v1865
    %1874 = vst [vmem:[%s13 + $0x18] sm:$0xff] %v1866
    %1875 = vst [vmem:[%s13 + $0x20] sm:$0xff] %v1867
    %1876 = vst [vmem:[%s13 + $0x28] sm:$0xff] %v1868
    %1877 = vst [vmem:[%s13 + $0x30] sm:$0xff] %v1869
    %1878 = vst [vmem:[%s13 + $0x38] sm:$0xff] %v1870
    // Predicated region
    $region62: #{dense_ae_forward.1} parent=1 // pred_check
      _
    $region63: #{dense_ae_forward.1} parent=1 // pred_check_branch
      %1880 = sbr.rel (0) target = $region65
    $region64: #{dense_ae_forward.1} parent=1 // pred_region
      _
    $region65: #{dense_ae_forward.1} parent=1 // pred_fallthru
      _
    // Predicated region
    $region66: #{dense_ae_forward.1} parent=1 // pred_check
      _
    $region67: #{dense_ae_forward.1} parent=1 // pred_check_branch
      %1882 = sbr.rel (0) target = $region69
    $region68: #{dense_ae_forward.1} parent=1 // pred_region
      _
    $region69: #{dense_ae_forward.1} parent=1 // pred_fallthru
      _
    %1883 = vsyncpa [#allocation3], 1
    %1884 = vsyncpa [#allocation5], 1

</llo_original>
